<compile_context>
chip_gen: v6e
topology: v6e:2x2x1
jax: 0.10.0
libtpu: 0.0.40
codegen_flags: <defaults>
</compile_context>

<pallas_src>
import jax
import jax.numpy as jnp
import numpy as np
from jax.experimental import pallas as pl
from jax.experimental.pallas import tpu as pltpu

# ---- model hyperparameters (module defaults, small batch) ----
BATCH = 8
IN_DIM = 32
HIDDEN_DIM = 256
OUT_DIM = 128
NUM_BLOCKS = 3
BN_EPS = 1e-5

# packed-buffer layout constants
_EARLY_ROWS = IN_DIM + 2 * HIDDEN_DIM          # w_in | w1[0] | w2[0]
_BIAS_COLS = HIDDEN_DIM + OUT_DIM              # b_in | b_out
_N_LATE = 2 * (NUM_BLOCKS - 1)                 # w1[1], w2[1], w1[2], w2[2]


def _batchnorm_train(y):
    """BatchNorm1d, training mode, gamma=1 / beta=0, biased variance (one pass)."""
    inv_n = 1.0 / y.shape[0]
    mu = jnp.sum(y, axis=0, keepdims=True) * inv_n
    ms = jnp.sum(y * y, axis=0, keepdims=True) * inv_n
    var = jnp.maximum(ms - mu * mu, 0.0)
    return (y - mu) * jax.lax.rsqrt(var + BN_EPS)


def resnet_mlp_kernel(
    x_ref,          # (B, IN_DIM)                  f32   VMEM
    early_w_ref,    # (_EARLY_ROWS, HIDDEN)        bf16  VMEM (w_in | w1[0] | w2[0])
    bias_ref,       # (1, _BIAS_COLS)              f32   VMEM (b_in | b_out)
    late_w_hbm,     # (_N_LATE, HIDDEN, HIDDEN)    bf16  HBM  (pl.ANY)
    w_out_hbm,      # (HIDDEN, OUT_DIM)            bf16  HBM  (pl.ANY)
    o_ref,          # (B, OUT_DIM)                 f32   VMEM
    late_w_vmem,    # (_N_LATE, HIDDEN, HIDDEN)    bf16  scratch
    w_out_vmem,     # (HIDDEN, OUT_DIM)            bf16  scratch
    sems,           # DMA semaphores, shape (NUM_BLOCKS,)
):
    # ---- kick off prefetch of late-block / output-proj weights, then compute while they fly ----
    block_copies = []
    for j in range(NUM_BLOCKS - 1):
        cp = pltpu.make_async_copy(
            late_w_hbm.at[pl.ds(2 * j, 2)],
            late_w_vmem.at[pl.ds(2 * j, 2)],
            sems.at[j],
        )
        cp.start()
        block_copies.append(cp)
    out_copy = pltpu.make_async_copy(w_out_hbm, w_out_vmem, sems.at[NUM_BLOCKS - 1])
    out_copy.start()

    # ---- input projection (weights already in VMEM) ----
    w_in = early_w_ref[0:IN_DIM, :]
    b_in = bias_ref[:, 0:HIDDEN_DIM]
    h = jnp.dot(x_ref[...].astype(jnp.bfloat16), w_in,
                preferred_element_type=jnp.float32) + b_in

    # ---- residual blocks (static unroll). Pre-BN linear biases dropped: training-mode BN's
    #      mean subtraction cancels them exactly; gamma=1, beta=0 folded away. ----
    for blk in range(NUM_BLOCKS):
        if blk == 0:
            w1 = early_w_ref[IN_DIM:IN_DIM + HIDDEN_DIM, :]
            w2 = early_w_ref[IN_DIM + HIDDEN_DIM:IN_DIM + 2 * HIDDEN_DIM, :]
        else:
            block_copies[blk - 1].wait()
            w1 = late_w_vmem[2 * (blk - 1)]
            w2 = late_w_vmem[2 * (blk - 1) + 1]
        y = jnp.dot(h.astype(jnp.bfloat16), w1, preferred_element_type=jnp.float32)
        y = jnp.maximum(_batchnorm_train(y), 0.0)                 # BN + ReLU
        y = jnp.dot(y.astype(jnp.bfloat16), w2, preferred_element_type=jnp.float32)
        y = _batchnorm_train(y)                                   # BN
        h = jnp.maximum(h + y, 0.0)                               # residual + ReLU

    # ---- output projection ----
    out_copy.wait()
    b_out = bias_ref[:, HIDDEN_DIM:HIDDEN_DIM + OUT_DIM]
    out = jnp.dot(h.astype(jnp.bfloat16), w_out_vmem[...],
                  preferred_element_type=jnp.float32) + b_out
    o_ref[...] = out.astype(o_ref.dtype)


# advisory cost estimate (tiny, latency-bound kernel — helps XLA place/overlap the call)
_FLOPS = 2 * BATCH * (IN_DIM * HIDDEN_DIM
                      + NUM_BLOCKS * 2 * HIDDEN_DIM * HIDDEN_DIM
                      + HIDDEN_DIM * OUT_DIM)
_BYTES = (2 * (_EARLY_ROWS * HIDDEN_DIM
               + _N_LATE * HIDDEN_DIM * HIDDEN_DIM
               + HIDDEN_DIM * OUT_DIM)
          + 4 * (_BIAS_COLS + BATCH * IN_DIM + BATCH * OUT_DIM))
_TRANSCENDENTALS = 2 * NUM_BLOCKS * HIDDEN_DIM   # one rsqrt per BN feature


@jax.jit
def resnet_mlp_pallas(x, params):
    early_w, bias, late_w, w_out = params
    vmem = pl.BlockSpec(memory_space=pltpu.MemorySpace.VMEM)
    hbm = pl.BlockSpec(memory_space=pl.ANY)
    return pl.pallas_call(
        resnet_mlp_kernel,
        out_shape=jax.ShapeDtypeStruct((x.shape[0], OUT_DIM), jnp.float32),
        in_specs=[vmem, vmem, vmem, hbm, hbm],
        out_specs=vmem,
        scratch_shapes=[
            pltpu.VMEM((_N_LATE, HIDDEN_DIM, HIDDEN_DIM), jnp.bfloat16),
            pltpu.VMEM((HIDDEN_DIM, OUT_DIM), jnp.bfloat16),
            pltpu.SemaphoreType.DMA((NUM_BLOCKS,)),
        ],
        cost_estimate=pl.CostEstimate(
            flops=_FLOPS, transcendentals=_TRANSCENDENTALS, bytes_accessed=_BYTES),
    )(x, early_w, bias, late_w, w_out)


def resnet_mlp_reference(x, params):
    """Pure-JAX reference mirroring the PyTorch forward (training-mode BN) with the same
    bf16-rounded matmul inputs as the kernel (f32 accumulation)."""
    early_w, bias, late_w, w_out = params
    w_in = early_w[0:IN_DIM].astype(jnp.float32)
    w1 = [early_w[IN_DIM:IN_DIM + HIDDEN_DIM].astype(jnp.float32)]
    w2 = [early_w[IN_DIM + HIDDEN_DIM:IN_DIM + 2 * HIDDEN_DIM].astype(jnp.float32)]
    for j in range(NUM_BLOCKS - 1):
        w1.append(late_w[2 * j].astype(jnp.float32))
        w2.append(late_w[2 * j + 1].astype(jnp.float32))
    b_in = bias[:, 0:HIDDEN_DIM]
    b_out = bias[:, HIDDEN_DIM:HIDDEN_DIM + OUT_DIM]

    def mm(a, w):
        return jnp.dot(a.astype(jnp.bfloat16).astype(jnp.float32), w)

    h = mm(x, w_in) + b_in
    for i in range(NUM_BLOCKS):
        y = mm(h, w1[i])
        y = jnp.maximum(_batchnorm_train(y), 0.0)
        y = mm(y, w2[i])
        y = _batchnorm_train(y)
        h = jnp.maximum(h + y, 0.0)
    return mm(h, w_out.astype(jnp.float32)) + b_out


def init_params(key):
    """Deterministic PyTorch-style init (Linear ~ U(-1/sqrt(fan_in), 1/sqrt(fan_in)); BN gamma=1,
    beta=0), packed into the kernel's fused buffers. Weights stored as (in, out) in bf16. The
    pre-BN linear biases and the identity BN affine params are folded away (see kernel notes)."""
    ks = jax.random.split(key, 5)

    def lin_w(k, fan_in, fan_out):
        bound = 1.0 / np.sqrt(fan_in)
        return jax.random.uniform(k, (fan_in, fan_out), jnp.float32, -bound, bound)

    def lin_b(k, fan_in, fan_out):
        bound = 1.0 / np.sqrt(fan_in)
        return jax.random.uniform(k, (1, fan_out), jnp.float32, -bound, bound)

    w_in = lin_w(ks[0], IN_DIM, HIDDEN_DIM)
    b_in = lin_b(ks[1], IN_DIM, HIDDEN_DIM)

    kb = jax.random.split(ks[2], 2 * NUM_BLOCKS)
    # order: w1[0], w2[0], w1[1], w2[1], w1[2], w2[2]
    block_w = [lin_w(kb[i], HIDDEN_DIM, HIDDEN_DIM) for i in range(2 * NUM_BLOCKS)]

    w_out = lin_w(ks[3], HIDDEN_DIM, OUT_DIM)
    b_out = lin_b(ks[4], HIDDEN_DIM, OUT_DIM)

    early_w = jnp.concatenate([w_in, block_w[0], block_w[1]], axis=0).astype(jnp.bfloat16)
    late_w = jnp.stack(block_w[2:], axis=0).astype(jnp.bfloat16)
    bias = jnp.concatenate([b_in, b_out], axis=1).astype(jnp.float32)
    w_out_bf16 = w_out.astype(jnp.bfloat16)
    return (early_w, bias, late_w, w_out_bf16)


if __name__ == "__main__":
    key = jax.random.PRNGKey(0)
    k_x, k_p = jax.random.split(key)
    x = jax.random.normal(k_x, (BATCH, IN_DIM), jnp.float32)
    params = init_params(k_p)

    out = jax.block_until_ready(resnet_mlp_pallas(x, params))
    ref = jax.block_until_ready(resnet_mlp_reference(x, params))

    # bf16 matmul inputs -> slightly looser tolerance than pure-f32.
    np.testing.assert_allclose(np.asarray(out), np.asarray(ref), rtol=2e-3, atol=2e-3)
    assert out.shape == (BATCH, OUT_DIM)
    print("KERNEL_OK")
</pallas_src>

<mosaic_0001>
module attributes {stable_mosaic.version = 11 : i64} {
  func.func @resnet_mlp_kernel(%arg0: memref<8x32xf32, #tpu.memory_space<vmem>>, %arg1: memref<544x256xbf16, #tpu.memory_space<vmem>>, %arg2: memref<1x384xf32, #tpu.memory_space<vmem>>, %arg3: memref<4x256x256xbf16, #tpu.memory_space<any>>, %arg4: memref<256x128xbf16, #tpu.memory_space<any>>, %arg5: memref<8x128xf32, #tpu.memory_space<vmem>>, %arg6: memref<4x256x256xbf16, #tpu.memory_space<vmem>>, %arg7: memref<256x128xbf16, #tpu.memory_space<vmem>>, %arg8: memref<3x!tpu.dma_semaphore, #tpu.memory_space<semaphore_mem>>) attributes {dimension_semantics = [], scalar_prefetch = 0 : i64, scratch_operands = 3 : i64, tpu.core_type = #tpu.core_type<tc>} {
    %c0_i32 = arith.constant 0 : i32
    %c0_i32_0 = arith.constant 0 : i32
    %c0_i32_1 = arith.constant 0 : i32
    %c0_i32_2 = arith.constant 0 : i32
    %0 = tpu.memref_slice %arg3[%c0_i32_0, %c0_i32_1, %c0_i32_2] : memref<4x256x256xbf16, #tpu.memory_space<any>> -> memref<2x256x256xbf16, #tpu.memory_space<any>>
    %c0_i32_3 = arith.constant 0 : i32
    %c0_i32_4 = arith.constant 0 : i32
    %c0_i32_5 = arith.constant 0 : i32
    %1 = tpu.memref_slice %arg6[%c0_i32_3, %c0_i32_4, %c0_i32_5] : memref<4x256x256xbf16, #tpu.memory_space<vmem>> -> memref<2x256x256xbf16, #tpu.memory_space<vmem>>
    %2 = tpu.memref_slice %arg8[%c0_i32] : memref<3x!tpu.dma_semaphore, #tpu.memory_space<semaphore_mem>> -> memref<1x!tpu.dma_semaphore, #tpu.memory_space<semaphore_mem>>
    %3 = tpu.memref_squeeze %2 : memref<1x!tpu.dma_semaphore, #tpu.memory_space<semaphore_mem>> -> memref<!tpu.dma_semaphore, #tpu.memory_space<semaphore_mem>>
    tpu.enqueue_dma source(%0 : memref<2x256x256xbf16, #tpu.memory_space<any>>) target(%1 : memref<2x256x256xbf16, #tpu.memory_space<vmem>>) target_semaphore(%3 : memref<!tpu.dma_semaphore, #tpu.memory_space<semaphore_mem>>)
    %c1_i32 = arith.constant 1 : i32
    %c2_i32 = arith.constant 2 : i32
    %c0_i32_6 = arith.constant 0 : i32
    %c0_i32_7 = arith.constant 0 : i32
    %4 = tpu.memref_slice %arg3[%c2_i32, %c0_i32_6, %c0_i32_7] : memref<4x256x256xbf16, #tpu.memory_space<any>> -> memref<2x256x256xbf16, #tpu.memory_space<any>>
    %c2_i32_8 = arith.constant 2 : i32
    %c0_i32_9 = arith.constant 0 : i32
    %c0_i32_10 = arith.constant 0 : i32
    %5 = tpu.memref_slice %arg6[%c2_i32_8, %c0_i32_9, %c0_i32_10] : memref<4x256x256xbf16, #tpu.memory_space<vmem>> -> memref<2x256x256xbf16, #tpu.memory_space<vmem>>
    %6 = tpu.memref_slice %arg8[%c1_i32] : memref<3x!tpu.dma_semaphore, #tpu.memory_space<semaphore_mem>> -> memref<1x!tpu.dma_semaphore, #tpu.memory_space<semaphore_mem>>
    %7 = tpu.memref_squeeze %6 : memref<1x!tpu.dma_semaphore, #tpu.memory_space<semaphore_mem>> -> memref<!tpu.dma_semaphore, #tpu.memory_space<semaphore_mem>>
    tpu.enqueue_dma source(%4 : memref<2x256x256xbf16, #tpu.memory_space<any>>) target(%5 : memref<2x256x256xbf16, #tpu.memory_space<vmem>>) target_semaphore(%7 : memref<!tpu.dma_semaphore, #tpu.memory_space<semaphore_mem>>)
    %c2_i32_11 = arith.constant 2 : i32
    %8 = tpu.memref_slice %arg8[%c2_i32_11] : memref<3x!tpu.dma_semaphore, #tpu.memory_space<semaphore_mem>> -> memref<1x!tpu.dma_semaphore, #tpu.memory_space<semaphore_mem>>
    %9 = tpu.memref_squeeze %8 : memref<1x!tpu.dma_semaphore, #tpu.memory_space<semaphore_mem>> -> memref<!tpu.dma_semaphore, #tpu.memory_space<semaphore_mem>>
    tpu.enqueue_dma source(%arg4 : memref<256x128xbf16, #tpu.memory_space<any>>) target(%arg7 : memref<256x128xbf16, #tpu.memory_space<vmem>>) target_semaphore(%9 : memref<!tpu.dma_semaphore, #tpu.memory_space<semaphore_mem>>)
    %c0 = arith.constant 0 : index
    %c0_12 = arith.constant 0 : index
    %10 = vector.load %arg1[%c0, %c0_12] : memref<544x256xbf16, #tpu.memory_space<vmem>>, vector<32x256xbf16>
    %c0_13 = arith.constant 0 : index
    %c0_14 = arith.constant 0 : index
    %11 = vector.load %arg2[%c0_13, %c0_14] : memref<1x384xf32, #tpu.memory_space<vmem>>, vector<1x256xf32>
    %c0_15 = arith.constant 0 : index
    %c0_16 = arith.constant 0 : index
    %12 = vector.load %arg0[%c0_15, %c0_16] : memref<8x32xf32, #tpu.memory_space<vmem>>, vector<8x32xf32>
    %13 = arith.truncf %12 : vector<8x32xf32> to vector<8x32xbf16>
    %cst = arith.constant dense<0.000000e+00> : vector<8x256xf32>
    %14 = tpu.matmul %13, %10, %cst {dimension_numbers = #tpu.dot_dimension_numbers<[1], [0], [0], [1], [0, 0, 1, 1], [], []>} : vector<8x32xbf16>, vector<32x256xbf16>, vector<8x256xf32> -> vector<8x256xf32>
    %15 = vector.broadcast %11 : vector<1x256xf32> to vector<8x256xf32>
    %16 = arith.addf %14, %15 : vector<8x256xf32>
    %c32 = arith.constant 32 : index
    %c0_17 = arith.constant 0 : index
    %17 = vector.load %arg1[%c32, %c0_17] : memref<544x256xbf16, #tpu.memory_space<vmem>>, vector<256x256xbf16>
    %c288 = arith.constant 288 : index
    %c0_18 = arith.constant 0 : index
    %18 = vector.load %arg1[%c288, %c0_18] : memref<544x256xbf16, #tpu.memory_space<vmem>>, vector<256x256xbf16>
    %19 = arith.truncf %16 : vector<8x256xf32> to vector<8x256xbf16>
    %cst_19 = arith.constant dense<0.000000e+00> : vector<8x256xf32>
    %20 = tpu.matmul %19, %17, %cst_19 {dimension_numbers = #tpu.dot_dimension_numbers<[1], [0], [0], [1], [0, 0, 1, 1], [], []>} : vector<8x256xbf16>, vector<256x256xbf16>, vector<8x256xf32> -> vector<8x256xf32>
    %cst_20 = arith.constant dense<0.000000e+00> : vector<256xf32>
    %21 = vector.multi_reduction <add>, %20, %cst_20 [0] : vector<8x256xf32> to vector<256xf32>
    %22 = vector.shape_cast %21 : vector<256xf32> to vector<1x256xf32>
    %cst_21 = arith.constant 1.250000e-01 : f32
    %23 = vector.broadcast %cst_21 : f32 to vector<1x256xf32>
    %24 = arith.mulf %22, %23 : vector<1x256xf32>
    %25 = arith.mulf %20, %20 : vector<8x256xf32>
    %cst_22 = arith.constant dense<0.000000e+00> : vector<256xf32>
    %26 = vector.multi_reduction <add>, %25, %cst_22 [0] : vector<8x256xf32> to vector<256xf32>
    %27 = vector.shape_cast %26 : vector<256xf32> to vector<1x256xf32>
    %cst_23 = arith.constant 1.250000e-01 : f32
    %28 = vector.broadcast %cst_23 : f32 to vector<1x256xf32>
    %29 = arith.mulf %27, %28 : vector<1x256xf32>
    %30 = arith.mulf %24, %24 : vector<1x256xf32>
    %31 = arith.subf %29, %30 : vector<1x256xf32>
    %cst_24 = arith.constant 0.000000e+00 : f32
    %32 = vector.broadcast %cst_24 : f32 to vector<1x256xf32>
    %33 = arith.maximumf %31, %32 : vector<1x256xf32>
    %34 = vector.broadcast %24 : vector<1x256xf32> to vector<8x256xf32>
    %35 = arith.subf %20, %34 : vector<8x256xf32>
    %cst_25 = arith.constant 9.99999974E-6 : f32
    %36 = vector.broadcast %cst_25 : f32 to vector<1x256xf32>
    %37 = arith.addf %33, %36 : vector<1x256xf32>
    %38 = math.rsqrt %37 : vector<1x256xf32>
    %39 = vector.broadcast %38 : vector<1x256xf32> to vector<8x256xf32>
    %40 = arith.mulf %35, %39 : vector<8x256xf32>
    %cst_26 = arith.constant 0.000000e+00 : f32
    %41 = vector.broadcast %cst_26 : f32 to vector<8x256xf32>
    %42 = arith.maximumf %40, %41 : vector<8x256xf32>
    %43 = arith.truncf %42 : vector<8x256xf32> to vector<8x256xbf16>
    %cst_27 = arith.constant dense<0.000000e+00> : vector<8x256xf32>
    %44 = tpu.matmul %43, %18, %cst_27 {dimension_numbers = #tpu.dot_dimension_numbers<[1], [0], [0], [1], [0, 0, 1, 1], [], []>} : vector<8x256xbf16>, vector<256x256xbf16>, vector<8x256xf32> -> vector<8x256xf32>
    %cst_28 = arith.constant dense<0.000000e+00> : vector<256xf32>
    %45 = vector.multi_reduction <add>, %44, %cst_28 [0] : vector<8x256xf32> to vector<256xf32>
    %46 = vector.shape_cast %45 : vector<256xf32> to vector<1x256xf32>
    %cst_29 = arith.constant 1.250000e-01 : f32
    %47 = vector.broadcast %cst_29 : f32 to vector<1x256xf32>
    %48 = arith.mulf %46, %47 : vector<1x256xf32>
    %49 = arith.mulf %44, %44 : vector<8x256xf32>
    %cst_30 = arith.constant dense<0.000000e+00> : vector<256xf32>
    %50 = vector.multi_reduction <add>, %49, %cst_30 [0] : vector<8x256xf32> to vector<256xf32>
    %51 = vector.shape_cast %50 : vector<256xf32> to vector<1x256xf32>
    %cst_31 = arith.constant 1.250000e-01 : f32
    %52 = vector.broadcast %cst_31 : f32 to vector<1x256xf32>
    %53 = arith.mulf %51, %52 : vector<1x256xf32>
    %54 = arith.mulf %48, %48 : vector<1x256xf32>
    %55 = arith.subf %53, %54 : vector<1x256xf32>
    %cst_32 = arith.constant 0.000000e+00 : f32
    %56 = vector.broadcast %cst_32 : f32 to vector<1x256xf32>
    %57 = arith.maximumf %55, %56 : vector<1x256xf32>
    %58 = vector.broadcast %48 : vector<1x256xf32> to vector<8x256xf32>
    %59 = arith.subf %44, %58 : vector<8x256xf32>
    %cst_33 = arith.constant 9.99999974E-6 : f32
    %60 = vector.broadcast %cst_33 : f32 to vector<1x256xf32>
    %61 = arith.addf %57, %60 : vector<1x256xf32>
    %62 = math.rsqrt %61 : vector<1x256xf32>
    %63 = vector.broadcast %62 : vector<1x256xf32> to vector<8x256xf32>
    %64 = arith.mulf %59, %63 : vector<8x256xf32>
    %65 = arith.addf %16, %64 : vector<8x256xf32>
    %cst_34 = arith.constant 0.000000e+00 : f32
    %66 = vector.broadcast %cst_34 : f32 to vector<8x256xf32>
    %67 = arith.maximumf %65, %66 : vector<8x256xf32>
    %c0_i32_35 = arith.constant 0 : i32
    %c0_i32_36 = arith.constant 0 : i32
    %c0_i32_37 = arith.constant 0 : i32
    %c0_i32_38 = arith.constant 0 : i32
    %68 = tpu.memref_slice %arg3[%c0_i32_36, %c0_i32_37, %c0_i32_38] : memref<4x256x256xbf16, #tpu.memory_space<any>> -> memref<2x256x256xbf16, #tpu.memory_space<any>>
    %c0_i32_39 = arith.constant 0 : i32
    %c0_i32_40 = arith.constant 0 : i32
    %c0_i32_41 = arith.constant 0 : i32
    %69 = tpu.memref_slice %arg6[%c0_i32_39, %c0_i32_40, %c0_i32_41] : memref<4x256x256xbf16, #tpu.memory_space<vmem>> -> memref<2x256x256xbf16, #tpu.memory_space<vmem>>
    %70 = tpu.memref_slice %arg8[%c0_i32_35] : memref<3x!tpu.dma_semaphore, #tpu.memory_space<semaphore_mem>> -> memref<1x!tpu.dma_semaphore, #tpu.memory_space<semaphore_mem>>
    %71 = tpu.memref_squeeze %70 : memref<1x!tpu.dma_semaphore, #tpu.memory_space<semaphore_mem>> -> memref<!tpu.dma_semaphore, #tpu.memory_space<semaphore_mem>>
    tpu.wait_dma2 semaphore(%71 : memref<!tpu.dma_semaphore, #tpu.memory_space<semaphore_mem>>) src(%68 : memref<2x256x256xbf16, #tpu.memory_space<any>>) dst(%69 : memref<2x256x256xbf16, #tpu.memory_space<vmem>>)
    %c0_42 = arith.constant 0 : index
    %c0_43 = arith.constant 0 : index
    %c0_44 = arith.constant 0 : index
    %72 = vector.load %arg6[%c0_42, %c0_43, %c0_44] : memref<4x256x256xbf16, #tpu.memory_space<vmem>>, vector<1x256x256xbf16>
    %73 = vector.shape_cast %72 : vector<1x256x256xbf16> to vector<256x256xbf16>
    %c1 = arith.constant 1 : index
    %c0_45 = arith.constant 0 : index
    %c0_46 = arith.constant 0 : index
    %74 = vector.load %arg6[%c1, %c0_45, %c0_46] : memref<4x256x256xbf16, #tpu.memory_space<vmem>>, vector<1x256x256xbf16>
    %75 = vector.shape_cast %74 : vector<1x256x256xbf16> to vector<256x256xbf16>
    %76 = arith.truncf %67 : vector<8x256xf32> to vector<8x256xbf16>
    %cst_47 = arith.constant dense<0.000000e+00> : vector<8x256xf32>
    %77 = tpu.matmul %76, %73, %cst_47 {dimension_numbers = #tpu.dot_dimension_numbers<[1], [0], [0], [1], [0, 0, 1, 1], [], []>} : vector<8x256xbf16>, vector<256x256xbf16>, vector<8x256xf32> -> vector<8x256xf32>
    %cst_48 = arith.constant dense<0.000000e+00> : vector<256xf32>
    %78 = vector.multi_reduction <add>, %77, %cst_48 [0] : vector<8x256xf32> to vector<256xf32>
    %79 = vector.shape_cast %78 : vector<256xf32> to vector<1x256xf32>
    %cst_49 = arith.constant 1.250000e-01 : f32
    %80 = vector.broadcast %cst_49 : f32 to vector<1x256xf32>
    %81 = arith.mulf %79, %80 : vector<1x256xf32>
    %82 = arith.mulf %77, %77 : vector<8x256xf32>
    %cst_50 = arith.constant dense<0.000000e+00> : vector<256xf32>
    %83 = vector.multi_reduction <add>, %82, %cst_50 [0] : vector<8x256xf32> to vector<256xf32>
    %84 = vector.shape_cast %83 : vector<256xf32> to vector<1x256xf32>
    %cst_51 = arith.constant 1.250000e-01 : f32
    %85 = vector.broadcast %cst_51 : f32 to vector<1x256xf32>
    %86 = arith.mulf %84, %85 : vector<1x256xf32>
    %87 = arith.mulf %81, %81 : vector<1x256xf32>
    %88 = arith.subf %86, %87 : vector<1x256xf32>
    %cst_52 = arith.constant 0.000000e+00 : f32
    %89 = vector.broadcast %cst_52 : f32 to vector<1x256xf32>
    %90 = arith.maximumf %88, %89 : vector<1x256xf32>
    %91 = vector.broadcast %81 : vector<1x256xf32> to vector<8x256xf32>
    %92 = arith.subf %77, %91 : vector<8x256xf32>
    %cst_53 = arith.constant 9.99999974E-6 : f32
    %93 = vector.broadcast %cst_53 : f32 to vector<1x256xf32>
    %94 = arith.addf %90, %93 : vector<1x256xf32>
    %95 = math.rsqrt %94 : vector<1x256xf32>
    %96 = vector.broadcast %95 : vector<1x256xf32> to vector<8x256xf32>
    %97 = arith.mulf %92, %96 : vector<8x256xf32>
    %cst_54 = arith.constant 0.000000e+00 : f32
    %98 = vector.broadcast %cst_54 : f32 to vector<8x256xf32>
    %99 = arith.maximumf %97, %98 : vector<8x256xf32>
    %100 = arith.truncf %99 : vector<8x256xf32> to vector<8x256xbf16>
    %cst_55 = arith.constant dense<0.000000e+00> : vector<8x256xf32>
    %101 = tpu.matmul %100, %75, %cst_55 {dimension_numbers = #tpu.dot_dimension_numbers<[1], [0], [0], [1], [0, 0, 1, 1], [], []>} : vector<8x256xbf16>, vector<256x256xbf16>, vector<8x256xf32> -> vector<8x256xf32>
    %cst_56 = arith.constant dense<0.000000e+00> : vector<256xf32>
    %102 = vector.multi_reduction <add>, %101, %cst_56 [0] : vector<8x256xf32> to vector<256xf32>
    %103 = vector.shape_cast %102 : vector<256xf32> to vector<1x256xf32>
    %cst_57 = arith.constant 1.250000e-01 : f32
    %104 = vector.broadcast %cst_57 : f32 to vector<1x256xf32>
    %105 = arith.mulf %103, %104 : vector<1x256xf32>
    %106 = arith.mulf %101, %101 : vector<8x256xf32>
    %cst_58 = arith.constant dense<0.000000e+00> : vector<256xf32>
    %107 = vector.multi_reduction <add>, %106, %cst_58 [0] : vector<8x256xf32> to vector<256xf32>
    %108 = vector.shape_cast %107 : vector<256xf32> to vector<1x256xf32>
    %cst_59 = arith.constant 1.250000e-01 : f32
    %109 = vector.broadcast %cst_59 : f32 to vector<1x256xf32>
    %110 = arith.mulf %108, %109 : vector<1x256xf32>
    %111 = arith.mulf %105, %105 : vector<1x256xf32>
    %112 = arith.subf %110, %111 : vector<1x256xf32>
    %cst_60 = arith.constant 0.000000e+00 : f32
    %113 = vector.broadcast %cst_60 : f32 to vector<1x256xf32>
    %114 = arith.maximumf %112, %113 : vector<1x256xf32>
    %115 = vector.broadcast %105 : vector<1x256xf32> to vector<8x256xf32>
    %116 = arith.subf %101, %115 : vector<8x256xf32>
    %cst_61 = arith.constant 9.99999974E-6 : f32
    %117 = vector.broadcast %cst_61 : f32 to vector<1x256xf32>
    %118 = arith.addf %114, %117 : vector<1x256xf32>
    %119 = math.rsqrt %118 : vector<1x256xf32>
    %120 = vector.broadcast %119 : vector<1x256xf32> to vector<8x256xf32>
    %121 = arith.mulf %116, %120 : vector<8x256xf32>
    %122 = arith.addf %67, %121 : vector<8x256xf32>
    %cst_62 = arith.constant 0.000000e+00 : f32
    %123 = vector.broadcast %cst_62 : f32 to vector<8x256xf32>
    %124 = arith.maximumf %122, %123 : vector<8x256xf32>
    %c1_i32_63 = arith.constant 1 : i32
    %c2_i32_64 = arith.constant 2 : i32
    %c0_i32_65 = arith.constant 0 : i32
    %c0_i32_66 = arith.constant 0 : i32
    %125 = tpu.memref_slice %arg3[%c2_i32_64, %c0_i32_65, %c0_i32_66] : memref<4x256x256xbf16, #tpu.memory_space<any>> -> memref<2x256x256xbf16, #tpu.memory_space<any>>
    %c2_i32_67 = arith.constant 2 : i32
    %c0_i32_68 = arith.constant 0 : i32
    %c0_i32_69 = arith.constant 0 : i32
    %126 = tpu.memref_slice %arg6[%c2_i32_67, %c0_i32_68, %c0_i32_69] : memref<4x256x256xbf16, #tpu.memory_space<vmem>> -> memref<2x256x256xbf16, #tpu.memory_space<vmem>>
    %127 = tpu.memref_slice %arg8[%c1_i32_63] : memref<3x!tpu.dma_semaphore, #tpu.memory_space<semaphore_mem>> -> memref<1x!tpu.dma_semaphore, #tpu.memory_space<semaphore_mem>>
    %128 = tpu.memref_squeeze %127 : memref<1x!tpu.dma_semaphore, #tpu.memory_space<semaphore_mem>> -> memref<!tpu.dma_semaphore, #tpu.memory_space<semaphore_mem>>
    tpu.wait_dma2 semaphore(%128 : memref<!tpu.dma_semaphore, #tpu.memory_space<semaphore_mem>>) src(%125 : memref<2x256x256xbf16, #tpu.memory_space<any>>) dst(%126 : memref<2x256x256xbf16, #tpu.memory_space<vmem>>)
    %c2 = arith.constant 2 : index
    %c0_70 = arith.constant 0 : index
    %c0_71 = arith.constant 0 : index
    %129 = vector.load %arg6[%c2, %c0_70, %c0_71] : memref<4x256x256xbf16, #tpu.memory_space<vmem>>, vector<1x256x256xbf16>
    %130 = vector.shape_cast %129 : vector<1x256x256xbf16> to vector<256x256xbf16>
    %c3 = arith.constant 3 : index
    %c0_72 = arith.constant 0 : index
    %c0_73 = arith.constant 0 : index
    %131 = vector.load %arg6[%c3, %c0_72, %c0_73] : memref<4x256x256xbf16, #tpu.memory_space<vmem>>, vector<1x256x256xbf16>
    %132 = vector.shape_cast %131 : vector<1x256x256xbf16> to vector<256x256xbf16>
    %133 = arith.truncf %124 : vector<8x256xf32> to vector<8x256xbf16>
    %cst_74 = arith.constant dense<0.000000e+00> : vector<8x256xf32>
    %134 = tpu.matmul %133, %130, %cst_74 {dimension_numbers = #tpu.dot_dimension_numbers<[1], [0], [0], [1], [0, 0, 1, 1], [], []>} : vector<8x256xbf16>, vector<256x256xbf16>, vector<8x256xf32> -> vector<8x256xf32>
    %cst_75 = arith.constant dense<0.000000e+00> : vector<256xf32>
    %135 = vector.multi_reduction <add>, %134, %cst_75 [0] : vector<8x256xf32> to vector<256xf32>
    %136 = vector.shape_cast %135 : vector<256xf32> to vector<1x256xf32>
    %cst_76 = arith.constant 1.250000e-01 : f32
    %137 = vector.broadcast %cst_76 : f32 to vector<1x256xf32>
    %138 = arith.mulf %136, %137 : vector<1x256xf32>
    %139 = arith.mulf %134, %134 : vector<8x256xf32>
    %cst_77 = arith.constant dense<0.000000e+00> : vector<256xf32>
    %140 = vector.multi_reduction <add>, %139, %cst_77 [0] : vector<8x256xf32> to vector<256xf32>
    %141 = vector.shape_cast %140 : vector<256xf32> to vector<1x256xf32>
    %cst_78 = arith.constant 1.250000e-01 : f32
    %142 = vector.broadcast %cst_78 : f32 to vector<1x256xf32>
    %143 = arith.mulf %141, %142 : vector<1x256xf32>
    %144 = arith.mulf %138, %138 : vector<1x256xf32>
    %145 = arith.subf %143, %144 : vector<1x256xf32>
    %cst_79 = arith.constant 0.000000e+00 : f32
    %146 = vector.broadcast %cst_79 : f32 to vector<1x256xf32>
    %147 = arith.maximumf %145, %146 : vector<1x256xf32>
    %148 = vector.broadcast %138 : vector<1x256xf32> to vector<8x256xf32>
    %149 = arith.subf %134, %148 : vector<8x256xf32>
    %cst_80 = arith.constant 9.99999974E-6 : f32
    %150 = vector.broadcast %cst_80 : f32 to vector<1x256xf32>
    %151 = arith.addf %147, %150 : vector<1x256xf32>
    %152 = math.rsqrt %151 : vector<1x256xf32>
    %153 = vector.broadcast %152 : vector<1x256xf32> to vector<8x256xf32>
    %154 = arith.mulf %149, %153 : vector<8x256xf32>
    %cst_81 = arith.constant 0.000000e+00 : f32
    %155 = vector.broadcast %cst_81 : f32 to vector<8x256xf32>
    %156 = arith.maximumf %154, %155 : vector<8x256xf32>
    %157 = arith.truncf %156 : vector<8x256xf32> to vector<8x256xbf16>
    %cst_82 = arith.constant dense<0.000000e+00> : vector<8x256xf32>
    %158 = tpu.matmul %157, %132, %cst_82 {dimension_numbers = #tpu.dot_dimension_numbers<[1], [0], [0], [1], [0, 0, 1, 1], [], []>} : vector<8x256xbf16>, vector<256x256xbf16>, vector<8x256xf32> -> vector<8x256xf32>
    %cst_83 = arith.constant dense<0.000000e+00> : vector<256xf32>
    %159 = vector.multi_reduction <add>, %158, %cst_83 [0] : vector<8x256xf32> to vector<256xf32>
    %160 = vector.shape_cast %159 : vector<256xf32> to vector<1x256xf32>
    %cst_84 = arith.constant 1.250000e-01 : f32
    %161 = vector.broadcast %cst_84 : f32 to vector<1x256xf32>
    %162 = arith.mulf %160, %161 : vector<1x256xf32>
    %163 = arith.mulf %158, %158 : vector<8x256xf32>
    %cst_85 = arith.constant dense<0.000000e+00> : vector<256xf32>
    %164 = vector.multi_reduction <add>, %163, %cst_85 [0] : vector<8x256xf32> to vector<256xf32>
    %165 = vector.shape_cast %164 : vector<256xf32> to vector<1x256xf32>
    %cst_86 = arith.constant 1.250000e-01 : f32
    %166 = vector.broadcast %cst_86 : f32 to vector<1x256xf32>
    %167 = arith.mulf %165, %166 : vector<1x256xf32>
    %168 = arith.mulf %162, %162 : vector<1x256xf32>
    %169 = arith.subf %167, %168 : vector<1x256xf32>
    %cst_87 = arith.constant 0.000000e+00 : f32
    %170 = vector.broadcast %cst_87 : f32 to vector<1x256xf32>
    %171 = arith.maximumf %169, %170 : vector<1x256xf32>
    %172 = vector.broadcast %162 : vector<1x256xf32> to vector<8x256xf32>
    %173 = arith.subf %158, %172 : vector<8x256xf32>
    %cst_88 = arith.constant 9.99999974E-6 : f32
    %174 = vector.broadcast %cst_88 : f32 to vector<1x256xf32>
    %175 = arith.addf %171, %174 : vector<1x256xf32>
    %176 = math.rsqrt %175 : vector<1x256xf32>
    %177 = vector.broadcast %176 : vector<1x256xf32> to vector<8x256xf32>
    %178 = arith.mulf %173, %177 : vector<8x256xf32>
    %179 = arith.addf %124, %178 : vector<8x256xf32>
    %cst_89 = arith.constant 0.000000e+00 : f32
    %180 = vector.broadcast %cst_89 : f32 to vector<8x256xf32>
    %181 = arith.maximumf %179, %180 : vector<8x256xf32>
    %c2_i32_90 = arith.constant 2 : i32
    %182 = tpu.memref_slice %arg8[%c2_i32_90] : memref<3x!tpu.dma_semaphore, #tpu.memory_space<semaphore_mem>> -> memref<1x!tpu.dma_semaphore, #tpu.memory_space<semaphore_mem>>
    %183 = tpu.memref_squeeze %182 : memref<1x!tpu.dma_semaphore, #tpu.memory_space<semaphore_mem>> -> memref<!tpu.dma_semaphore, #tpu.memory_space<semaphore_mem>>
    tpu.wait_dma2 semaphore(%183 : memref<!tpu.dma_semaphore, #tpu.memory_space<semaphore_mem>>) src(%arg4 : memref<256x128xbf16, #tpu.memory_space<any>>) dst(%arg7 : memref<256x128xbf16, #tpu.memory_space<vmem>>)
    %c0_91 = arith.constant 0 : index
    %c256 = arith.constant 256 : index
    %184 = vector.load %arg2[%c0_91, %c256] : memref<1x384xf32, #tpu.memory_space<vmem>>, vector<1x128xf32>
    %185 = arith.truncf %181 : vector<8x256xf32> to vector<8x256xbf16>
    %c0_92 = arith.constant 0 : index
    %c0_93 = arith.constant 0 : index
    %186 = vector.load %arg7[%c0_92, %c0_93] : memref<256x128xbf16, #tpu.memory_space<vmem>>, vector<256x128xbf16>
    %cst_94 = arith.constant dense<0.000000e+00> : vector<8x128xf32>
    %187 = tpu.matmul %185, %186, %cst_94 {dimension_numbers = #tpu.dot_dimension_numbers<[1], [0], [0], [1], [0, 0, 1, 1], [], []>} : vector<8x256xbf16>, vector<256x128xbf16>, vector<8x128xf32> -> vector<8x128xf32>
    %188 = vector.broadcast %184 : vector<1x128xf32> to vector<8x128xf32>
    %189 = arith.addf %187, %188 : vector<8x128xf32>
    %c0_95 = arith.constant 0 : index
    %c0_96 = arith.constant 0 : index
    %190 = vector.load %arg5[%c0_95, %c0_96] : memref<8x128xf32, #tpu.memory_space<vmem>>, vector<8x128xf32>
    tpu.vector_store %arg5[%c0_95, %c0_96], %189 {strides = array<i32>} : memref<8x128xf32, #tpu.memory_space<vmem>>, vector<8x128xf32>,
    return
  }
}

</mosaic_0001>

<llo_original>
// kernel: resnet_mlp_pallas.1
$region0: #{resnet_mlp_pallas.1}
  #allocation0 [shape = 'u32[]', space=smem, size = 0x4, offset = 0x4, fixed_abs, tag = 'smem constant byte address 0x4 - core index']
  #allocation1 [shape = 'u32[144,128]{1,0:T(1,128)}', space=vmem, size = 0x12000, scoped, tag = 'internal scratch']
  #allocation2 [shape = 'bf16[4,256,256]{2,1,0:T(8,128)(2,1)}', space=vmem, size = 0x80000, scoped, tag = 'scratch operand']
  #allocation3 [shape = 'bf16[256,128]{1,0:T(8,128)(2,1)}', space=vmem, size = 0x10000, scoped, tag = 'scratch operand']
  #allocation4 [shape = 's32[3]{0}', space=sflag, size = 0xc, scoped, tag = 'scratch operand']
  #allocation11 [shape = 's32[]', space=sflag, size = 0x4, offset = 0, fixed_abs, tag = 'sflag constant byte address 0x0 - dummy sync flag']
  #allocation12 [shape = 's32[]', space=sflag, size = 0x4, offset = 0, fixed_abs, tag = 'sflag constant byte address 0x0 - dummy sync flag']
  #allocation13 [shape = 'u32[]', space=smem, size = 0x4, offset = 0x44, fixed_abs, tag = 'smem constant byte address 0x44 - assertion arg 0']
  #allocation14 [shape = 'u32[]', space=smem, size = 0x4, offset = 0x48, fixed_abs, tag = 'smem constant byte address 0x48 - assertion arg 1']
  #allocation15 [shape = 's32[]', space=sflag, size = 0x4, offset = 0, fixed_abs, tag = 'sflag constant byte address 0x0 - dummy sync flag']
  #allocation16 [shape = 's32[]', space=sflag, size = 0x4, offset = 0, fixed_abs, tag = 'sflag constant byte address 0x0 - dummy sync flag']
  #allocation17 [shape = 's32[]', space=sflag, size = 0x4, offset = 0, fixed_abs, tag = 'sflag constant byte address 0x0 - dummy sync flag']
  #allocation18 [shape = 's32[]', space=sflag, size = 0x4, offset = 0, fixed_abs, tag = 'sflag constant byte address 0x0 - dummy sync flag']
  %s0 = inlined_call_operand.hbm [shape: f32[8,32], index: 0, kind: input, shape index: {}]
  %s1 = inlined_call_operand.hbm [shape: bf16[544,256], index: 1, kind: input, shape index: {}]
  %s2 = inlined_call_operand.vmem [shape: f32[1,384], index: 2, kind: input, shape index: {}]
  %s3 = inlined_call_operand.hbm [shape: bf16[4,256,256], index: 3, kind: input, shape index: {}]
  %s4 = inlined_call_operand.hbm [shape: bf16[256,128], index: 4, kind: input, shape index: {}]
  %s5 = inlined_call_operand.hbm [shape: f32[8,128], index: 5, kind: output, shape index: {}]
  %s6 = sld [smem:[#allocation0]]
  $region42: #{resnet_mlp_pallas.1} parent=0
    _
  %s8 = ssub.s32 1, %s6
  %s9 = scalar_select 0, %s8, %s6
  $region1: #{resnet_mlp_pallas.1} parent=0
    #allocation5 [shape = 'u8[4096]{0}', space=vmem, size = 0x1000, scoped, tag = 'input window, operand 0, single buffered']
    #allocation6 [shape = 's32[1]{0}', space=sflag, size = 0x4, scoped, tag = 'scoped memory for resnet_mlp_pallas.1']
    #allocation7 [shape = 's32[1]{0}', space=sflag, size = 0x4, scoped, tag = 'scoped memory for resnet_mlp_pallas.1']
    #allocation8 [shape = 'u8[278528]{0}', space=vmem, size = 0x44000, scoped, tag = 'input window, operand 1, single buffered']
    #allocation9 [shape = 's32[1]{0}', space=sflag, size = 0x4, scoped, tag = 'scoped memory for resnet_mlp_pallas.1']
    #allocation10 [shape = 'u8[4096]{0}', space=vmem, size = 0x1000, scoped, tag = 'output window, operand 0, single buffered']
    %10 = vsyncpa [#allocation6], 0
    %11 = vsyncpa [#allocation9], 0
    %12 = vsyncpa [#allocation7], 0
    // Predicated region
    $region2: #{resnet_mlp_pallas.1} parent=1 // pred_check
      _
    $region3: #{resnet_mlp_pallas.1} parent=1 // pred_check_branch
      %14 = sbr.rel (0) target = $region5
    $region4: #{resnet_mlp_pallas.1} parent=1 // pred_region
      %s16 = ssub.s32 128, 128
      %17 = vsyncadd [#allocation6], %s16
      %s19 = sshll.u32 [#allocation5], 4
      %s20 = int_to_ptr.vmem [resolvable:$true] %s19
      %22 = dma.hbm_to_vmem [thread:$0]  %s0, 128, %s20, [#allocation6]
    $region5: #{resnet_mlp_pallas.1} parent=1 // pred_fallthru
      _
    // Predicated region
    $region6: #{resnet_mlp_pallas.1} parent=1 // pred_check
      _
    $region7: #{resnet_mlp_pallas.1} parent=1 // pred_check_branch
      %24 = sbr.rel (0) target = $region9
    $region8: #{resnet_mlp_pallas.1} parent=1 // pred_region
      %s26 = ssub.s32 8704, 8704
      %27 = vsyncadd [#allocation9], %s26
      %s28 = sshll.u32 [#allocation8], 4
      %s29 = int_to_ptr.vmem [resolvable:$true] %s28
      %34 = dma.hbm_to_vmem [thread:$0]  %s1, 8704, %s29, [#allocation9], 128, 128, 8
    $region9: #{resnet_mlp_pallas.1} parent=1 // pred_fallthru
      _
    // Predicated region
    $region10: #{resnet_mlp_pallas.1} parent=1 // pred_check
      _
    $region11: #{resnet_mlp_pallas.1} parent=1 // pred_check_branch
      %36 = sbr.rel (0) target = $region13
    $region12: #{resnet_mlp_pallas.1} parent=1 // pred_region
      _
    $region13: #{resnet_mlp_pallas.1} parent=1 // pred_fallthru
      _
    // Predicated region
    $region14: #{resnet_mlp_pallas.1} parent=1 // pred_check
      _
    $region15: #{resnet_mlp_pallas.1} parent=1 // pred_check_branch
      %38 = sbr.rel (0) target = $region17
    $region16: #{resnet_mlp_pallas.1} parent=1 // pred_region
      %39 = dma.done [#allocation6], 128
    $region17: #{resnet_mlp_pallas.1} parent=1 // pred_fallthru
      _
    // Predicated region
    $region18: #{resnet_mlp_pallas.1} parent=1 // pred_check
      _
    $region19: #{resnet_mlp_pallas.1} parent=1 // pred_check_branch
      %41 = sbr.rel (0) target = $region21
    $region20: #{resnet_mlp_pallas.1} parent=1 // pred_region
      %42 = dma.done [#allocation9], 8704
    $region21: #{resnet_mlp_pallas.1} parent=1 // pred_fallthru
      _
    // Predicated region
    $region22: #{resnet_mlp_pallas.1} parent=1 // pred_check
      _
    $region23: #{resnet_mlp_pallas.1} parent=1 // pred_check_branch
      %45 = sbr.rel target = $region25
    $region24: #{resnet_mlp_pallas.1} parent=1 // pred_region
      %46 = sst [smem:[#allocation13]] [#allocation12]
      %47 = sst [smem:[#allocation14]] [#allocation11]
    $region25: #{resnet_mlp_pallas.1} parent=1 // pred_fallthru
      _
    %49 = shalt.err (0)
    %s51 = sshll.u32 [#allocation2], 4
    %s52 = int_to_ptr.vmem [resolvable:$true] %s51
    %54 = dma.hbm_to_vmem [thread:$0]  %s3, 8192, %s52, [#allocation4]
    %s55 = scalar_lea.hbm %s3, 8192
    %s56 = scalar_lea.vmem [#allocation2], 512
    %s57 = scalar_lea.sflag [#allocation4], 1
    // Predicated region
    $region26: #{resnet_mlp_pallas.1} parent=1 // pred_check
      _
    $region27: #{resnet_mlp_pallas.1} parent=1 // pred_check_branch
      %59 = sbr.rel target = $region29
    $region28: #{resnet_mlp_pallas.1} parent=1 // pred_region
      %60 = sst [smem:[#allocation13]] [#allocation16]
      %61 = sst [smem:[#allocation14]] [#allocation15]
    $region29: #{resnet_mlp_pallas.1} parent=1 // pred_fallthru
      _
    %63 = shalt.err (0)
    %s65 = sshll.u32 %s56, 4
    %s66 = int_to_ptr.vmem [resolvable:$true] %s65
    %68 = dma.hbm_to_vmem [thread:$0]  %s55, 8192, %s66, %s57
    %s69 = scalar_lea.sflag [#allocation4], 2
    // Predicated region
    $region30: #{resnet_mlp_pallas.1} parent=1 // pred_check
      _
    $region31: #{resnet_mlp_pallas.1} parent=1 // pred_check_branch
      %71 = sbr.rel target = $region33
    $region32: #{resnet_mlp_pallas.1} parent=1 // pred_region
      %72 = sst [smem:[#allocation13]] [#allocation18]
      %73 = sst [smem:[#allocation14]] [#allocation17]
    $region33: #{resnet_mlp_pallas.1} parent=1 // pred_fallthru
      _
    %75 = shalt.err (0)
    %s77 = sshll.u32 [#allocation3], 4
    %s78 = int_to_ptr.vmem [resolvable:$true] %s77
    %80 = dma.hbm_to_vmem [thread:$0]  %s4, 2048, %s78, %s69
    %v81 = vld [vmem:[#allocation8] sm:$0xff]
    %v82 = vld [vmem:[#allocation8 + $0x8] sm:$0xff]
    %v83 = vld [vmem:[#allocation8 + $0x10] sm:$0xff]
    %v84 = vld [vmem:[#allocation8 + $0x18] sm:$0xff]
    %v85 = vld [vmem:[%s2] sm:$0x3]
    %v86 = vld [vmem:[#allocation5] sm:$0xff]
    %v87 = vpack.c.bf16 %v86, %v86
    %v89 = vlaneseq
    %v90 = vshrl.u32 %v89, 7
    %v91 = vsub.s32 0, %v90
    %v92 = vrot.slane %v85, %v91
    %v93 = vlaneseq
    %v94 = vshrl.u32 %v93, 7
    %v95 = vsub.s32 1, %v94
    %v96 = vrot.slane %v85, %v95
    %v103 = vunpack.c.l.b16 %v81
    %v104 = vunpack.c.h.b16 %v81
    %v105 = vunpack.c.l.b16 %v82
    %v106 = vunpack.c.h.b16 %v82
    %v107 = vunpack.c.l.b16 %v83
    %v108 = vunpack.c.h.b16 %v83
    %v109 = vunpack.c.l.b16 %v84
    %v110 = vunpack.c.h.b16 %v84
    %v111 = vpack.c.b16 %v105, %v103
    %v112 = vpack.c.b16 %v106, %v104
    %v113 = vpack.c.b16 %v109, %v107
    %v114 = vpack.c.b16 %v110, %v108
    %vm119 = vcmask 261120
    %v121 = vsel %vm119, %v87, 0
    %123 = vmatprep.subr.bf16.mxu0 0
    %124 = vmatpush1.bf16.msra.mxu0 0
    %125 = vmatprep.subr.bf16.mxu0 0
    %126 = vmatpush1.bf16.msra.mxu0 0
    %127 = vmatprep.subr.bf16.mxu0 0
    %128 = vmatpush1.bf16.msra.mxu0 0
    %129 = vmatprep.subr.bf16.mxu0 0
    %130 = vmatpush1.bf16.msra.mxu0 0
    %131 = vmatprep.subr.bf16.mxu0 0
    %132 = vmatpush1.bf16.msra.mxu0 0
    %133 = vmatprep.subr.bf16.mxu0 0
    %134 = vmatpush1.bf16.msra.mxu0 0
    %135 = vmatprep.subr.bf16.mxu0 %v114
    %136 = vmatpush1.bf16.msra.mxu0 %v113
    %137 = vmatprep.subr.bf16.mxu0 %v112
    %138 = vmatpush1.bf16.msra.mxu0 %v111
    %139 = vmatprep.subr.bf16.mxu0 0
    %140 = vmatpush2.bf16.msra.mxu0 0
    %141 = vmatprep.subr.bf16.mxu0 0
    %142 = vmatpush2.bf16.msra.mxu0 0
    %143 = vmatprep.subr.bf16.mxu0 0
    %144 = vmatpush2.bf16.msra.mxu0 0
    %145 = vmatprep.subr.bf16.mxu0 0
    %146 = vmatpush2.bf16.msra.mxu0 0
    %147 = vmatprep.subr.bf16.mxu0 0
    %148 = vmatpush2.bf16.msra.mxu0 0
    %149 = vmatprep.subr.bf16.mxu0 0
    %150 = vmatpush2.bf16.msra.mxu0 0
    %151 = vmatprep.subr.bf16.mxu0 0
    %152 = vmatpush2.bf16.msra.mxu0 0
    %153 = vmatprep.subr.bf16.mxu0 0
    %154 = vmatpush2.bf16.msra.mxu0 0
    %155 = vmatprep.mubr.bf16.mxu0 0
    %156 = vmatmul.mubr.bf16.gmra.mxu0 %v121
    %v157 = vpop.f32.mrf.mxu0
    %v158 = vadd.f32 %v92, %v157
    %v159 = vpop.f32.mrf.mxu0
    %v160 = vadd.f32 %v96, %v159
    %v161 = vpop.f32.mrf.mxu0
    %v162 = vpop.f32.mrf.mxu0
    %163 = vdwg.mxu0
    %v164 = vld [vmem:[#allocation8 + $0x20] sm:$0xff]
    %v165 = vld [vmem:[#allocation8 + $0x28] sm:$0xff]
    %v166 = vld [vmem:[#allocation8 + $0x30] sm:$0xff]
    %v167 = vld [vmem:[#allocation8 + $0x38] sm:$0xff]
    %v168 = vld [vmem:[#allocation8 + $0x40] sm:$0xff]
    %v169 = vld [vmem:[#allocation8 + $0x48] sm:$0xff]
    %v170 = vld [vmem:[#allocation8 + $0x50] sm:$0xff]
    %v171 = vld [vmem:[#allocation8 + $0x58] sm:$0xff]
    %v172 = vld [vmem:[#allocation8 + $0x60] sm:$0xff]
    %v173 = vld [vmem:[#allocation8 + $0x68] sm:$0xff]
    %v174 = vld [vmem:[#allocation8 + $0x70] sm:$0xff]
    %v175 = vld [vmem:[#allocation8 + $0x78] sm:$0xff]
    %v176 = vld [vmem:[#allocation8 + $0x80] sm:$0xff]
    %v177 = vld [vmem:[#allocation8 + $0x88] sm:$0xff]
    %v178 = vld [vmem:[#allocation8 + $0x90] sm:$0xff]
    %v179 = vld [vmem:[#allocation8 + $0x98] sm:$0xff]
    %v180 = vld [vmem:[#allocation8 + $0xa0] sm:$0xff]
    %v181 = vld [vmem:[#allocation8 + $0xa8] sm:$0xff]
    %v182 = vld [vmem:[#allocation8 + $0xb0] sm:$0xff]
    %v183 = vld [vmem:[#allocation8 + $0xb8] sm:$0xff]
    %v184 = vld [vmem:[#allocation8 + $0xc0] sm:$0xff]
    %v185 = vld [vmem:[#allocation8 + $0xc8] sm:$0xff]
    %v186 = vld [vmem:[#allocation8 + $0xd0] sm:$0xff]
    %v187 = vld [vmem:[#allocation8 + $0xd8] sm:$0xff]
    %v188 = vld [vmem:[#allocation8 + $0xe0] sm:$0xff]
    %v189 = vld [vmem:[#allocation8 + $0xe8] sm:$0xff]
    %v190 = vld [vmem:[#allocation8 + $0xf0] sm:$0xff]
    %v191 = vld [vmem:[#allocation8 + $0xf8] sm:$0xff]
    %v192 = vld [vmem:[#allocation8 + $0x100] sm:$0xff]
    %v193 = vld [vmem:[#allocation8 + $0x108] sm:$0xff]
    %v194 = vld [vmem:[#allocation8 + $0x110] sm:$0xff]
    %v195 = vld [vmem:[#allocation8 + $0x118] sm:$0xff]
    %v196 = vld [vmem:[#allocation8 + $0x120] sm:$0xff]
    %v197 = vld [vmem:[#allocation8 + $0x128] sm:$0xff]
    %v198 = vld [vmem:[#allocation8 + $0x130] sm:$0xff]
    %v199 = vld [vmem:[#allocation8 + $0x138] sm:$0xff]
    %v200 = vld [vmem:[#allocation8 + $0x140] sm:$0xff]
    %v201 = vld [vmem:[#allocation8 + $0x148] sm:$0xff]
    %v202 = vld [vmem:[#allocation8 + $0x150] sm:$0xff]
    %v203 = vld [vmem:[#allocation8 + $0x158] sm:$0xff]
    %v204 = vld [vmem:[#allocation8 + $0x160] sm:$0xff]
    %v205 = vld [vmem:[#allocation8 + $0x168] sm:$0xff]
    %v206 = vld [vmem:[#allocation8 + $0x170] sm:$0xff]
    %v207 = vld [vmem:[#allocation8 + $0x178] sm:$0xff]
    %v208 = vld [vmem:[#allocation8 + $0x180] sm:$0xff]
    %v209 = vld [vmem:[#allocation8 + $0x188] sm:$0xff]
    %v210 = vld [vmem:[#allocation8 + $0x190] sm:$0xff]
    %v211 = vld [vmem:[#allocation8 + $0x198] sm:$0xff]
    %v212 = vld [vmem:[#allocation8 + $0x1a0] sm:$0xff]
    %v213 = vld [vmem:[#allocation8 + $0x1a8] sm:$0xff]
    %v214 = vld [vmem:[#allocation8 + $0x1b0] sm:$0xff]
    %v215 = vld [vmem:[#allocation8 + $0x1b8] sm:$0xff]
    %v216 = vld [vmem:[#allocation8 + $0x1c0] sm:$0xff]
    %v217 = vld [vmem:[#allocation8 + $0x1c8] sm:$0xff]
    %v218 = vld [vmem:[#allocation8 + $0x1d0] sm:$0xff]
    %v219 = vld [vmem:[#allocation8 + $0x1d8] sm:$0xff]
    %v220 = vld [vmem:[#allocation8 + $0x1e0] sm:$0xff]
    %v221 = vld [vmem:[#allocation8 + $0x1e8] sm:$0xff]
    %v222 = vld [vmem:[#allocation8 + $0x1f0] sm:$0xff]
    %v223 = vld [vmem:[#allocation8 + $0x1f8] sm:$0xff]
    %v224 = vld [vmem:[#allocation8 + $0x200] sm:$0xff]
    %v225 = vld [vmem:[#allocation8 + $0x208] sm:$0xff]
    %v226 = vld [vmem:[#allocation8 + $0x210] sm:$0xff]
    %v227 = vld [vmem:[#allocation8 + $0x218] sm:$0xff]
    %v228 = vpack.c.bf16 %v158, %v158
    %v229 = vpack.c.bf16 %v160, %v160
    %v262 = vunpack.c.l.b16 %v164
    %v263 = vunpack.c.h.b16 %v164
    %v264 = vunpack.c.l.b16 %v165
    %v265 = vunpack.c.h.b16 %v165
    %v266 = vunpack.c.l.b16 %v166
    %v267 = vunpack.c.h.b16 %v166
    %v268 = vunpack.c.l.b16 %v167
    %v269 = vunpack.c.h.b16 %v167
    %v270 = vunpack.c.l.b16 %v168
    %v271 = vunpack.c.h.b16 %v168
    %v272 = vunpack.c.l.b16 %v169
    %v273 = vunpack.c.h.b16 %v169
    %v274 = vunpack.c.l.b16 %v170
    %v275 = vunpack.c.h.b16 %v170
    %v276 = vunpack.c.l.b16 %v171
    %v277 = vunpack.c.h.b16 %v171
    %v278 = vunpack.c.l.b16 %v172
    %v279 = vunpack.c.h.b16 %v172
    %v280 = vunpack.c.l.b16 %v173
    %v281 = vunpack.c.h.b16 %v173
    %v282 = vunpack.c.l.b16 %v174
    %v283 = vunpack.c.h.b16 %v174
    %v284 = vunpack.c.l.b16 %v175
    %v285 = vunpack.c.h.b16 %v175
    %v286 = vunpack.c.l.b16 %v176
    %v287 = vunpack.c.h.b16 %v176
    %v288 = vunpack.c.l.b16 %v177
    %v289 = vunpack.c.h.b16 %v177
    %v290 = vunpack.c.l.b16 %v178
    %v291 = vunpack.c.h.b16 %v178
    %v292 = vunpack.c.l.b16 %v179
    %v293 = vunpack.c.h.b16 %v179
    %v294 = vunpack.c.l.b16 %v180
    %v295 = vunpack.c.h.b16 %v180
    %v296 = vunpack.c.l.b16 %v181
    %v297 = vunpack.c.h.b16 %v181
    %v298 = vunpack.c.l.b16 %v182
    %v299 = vunpack.c.h.b16 %v182
    %v300 = vunpack.c.l.b16 %v183
    %v301 = vunpack.c.h.b16 %v183
    %v302 = vunpack.c.l.b16 %v184
    %v303 = vunpack.c.h.b16 %v184
    %v304 = vunpack.c.l.b16 %v185
    %v305 = vunpack.c.h.b16 %v185
    %v306 = vunpack.c.l.b16 %v186
    %v307 = vunpack.c.h.b16 %v186
    %v308 = vunpack.c.l.b16 %v187
    %v309 = vunpack.c.h.b16 %v187
    %v310 = vunpack.c.l.b16 %v188
    %v311 = vunpack.c.h.b16 %v188
    %v312 = vunpack.c.l.b16 %v189
    %v313 = vunpack.c.h.b16 %v189
    %v314 = vunpack.c.l.b16 %v190
    %v315 = vunpack.c.h.b16 %v190
    %v316 = vunpack.c.l.b16 %v191
    %v317 = vunpack.c.h.b16 %v191
    %v318 = vunpack.c.l.b16 %v192
    %v319 = vunpack.c.h.b16 %v192
    %v320 = vunpack.c.l.b16 %v193
    %v321 = vunpack.c.h.b16 %v193
    %v322 = vunpack.c.l.b16 %v194
    %v323 = vunpack.c.h.b16 %v194
    %v324 = vunpack.c.l.b16 %v195
    %v325 = vunpack.c.h.b16 %v195
    %v326 = vpack.c.b16 %v264, %v262
    %v327 = vpack.c.b16 %v265, %v263
    %v328 = vpack.c.b16 %v268, %v266
    %v329 = vpack.c.b16 %v269, %v267
    %v330 = vpack.c.b16 %v272, %v270
    %v331 = vpack.c.b16 %v273, %v271
    %v332 = vpack.c.b16 %v276, %v274
    %v333 = vpack.c.b16 %v277, %v275
    %v334 = vpack.c.b16 %v280, %v278
    %v335 = vpack.c.b16 %v281, %v279
    %v336 = vpack.c.b16 %v284, %v282
    %v337 = vpack.c.b16 %v285, %v283
    %v338 = vpack.c.b16 %v288, %v286
    %v339 = vpack.c.b16 %v289, %v287
    %v340 = vpack.c.b16 %v292, %v290
    %v341 = vpack.c.b16 %v293, %v291
    %v342 = vpack.c.b16 %v296, %v294
    %v343 = vpack.c.b16 %v297, %v295
    %v344 = vpack.c.b16 %v300, %v298
    %v345 = vpack.c.b16 %v301, %v299
    %v346 = vpack.c.b16 %v304, %v302
    %v347 = vpack.c.b16 %v305, %v303
    %v348 = vpack.c.b16 %v308, %v306
    %v349 = vpack.c.b16 %v309, %v307
    %v350 = vpack.c.b16 %v312, %v310
    %v351 = vpack.c.b16 %v313, %v311
    %v352 = vpack.c.b16 %v316, %v314
    %v353 = vpack.c.b16 %v317, %v315
    %v354 = vpack.c.b16 %v320, %v318
    %v355 = vpack.c.b16 %v321, %v319
    %v356 = vpack.c.b16 %v324, %v322
    %v357 = vpack.c.b16 %v325, %v323
    %390 = vmatprep.subr.bf16.mxu0 %v341
    %391 = vmatpush1.bf16.msra.mxu0 %v340
    %392 = vmatprep.subr.bf16.mxu0 %v339
    %393 = vmatpush1.bf16.msra.mxu0 %v338
    %394 = vmatprep.subr.bf16.mxu0 %v337
    %395 = vmatpush1.bf16.msra.mxu0 %v336
    %396 = vmatprep.subr.bf16.mxu0 %v335
    %397 = vmatpush1.bf16.msra.mxu0 %v334
    %398 = vmatprep.subr.bf16.mxu0 %v333
    %399 = vmatpush1.bf16.msra.mxu0 %v332
    %400 = vmatprep.subr.bf16.mxu0 %v331
    %401 = vmatpush1.bf16.msra.mxu0 %v330
    %402 = vmatprep.subr.bf16.mxu0 %v329
    %403 = vmatpush1.bf16.msra.mxu0 %v328
    %404 = vmatprep.subr.bf16.mxu0 %v327
    %405 = vmatpush1.bf16.msra.mxu0 %v326
    %406 = vmatprep.subr.bf16.mxu0 %v357
    %407 = vmatpush2.bf16.msra.mxu0 %v356
    %408 = vmatprep.subr.bf16.mxu0 %v355
    %409 = vmatpush2.bf16.msra.mxu0 %v354
    %410 = vmatprep.subr.bf16.mxu0 %v353
    %411 = vmatpush2.bf16.msra.mxu0 %v352
    %412 = vmatprep.subr.bf16.mxu0 %v351
    %413 = vmatpush2.bf16.msra.mxu0 %v350
    %414 = vmatprep.subr.bf16.mxu0 %v349
    %415 = vmatpush2.bf16.msra.mxu0 %v348
    %416 = vmatprep.subr.bf16.mxu0 %v347
    %417 = vmatpush2.bf16.msra.mxu0 %v346
    %418 = vmatprep.subr.bf16.mxu0 %v345
    %419 = vmatpush2.bf16.msra.mxu0 %v344
    %420 = vmatprep.subr.bf16.mxu0 %v343
    %421 = vmatpush2.bf16.msra.mxu0 %v342
    %422 = vmatprep.mubr.bf16.mxu0 %v229
    %423 = vmatmul.mubr.bf16.gmra.mxu0 %v228
    %v424 = vpop.f32.mrf.mxu0
    %v425 = vadd.f32 0.0, %v424
    %v426 = vpop.f32.mrf.mxu0
    %v427 = vadd.f32 0.0, %v426
    %v428 = vpop.f32.mrf.mxu0
    %v429 = vpop.f32.mrf.mxu0
    %430 = vdwg.mxu0
    %v431 = vrot.slane %v425, 4
    %v432 = vadd.f32 %v425, %v431
    %v433 = vrot.slane %v432, 2
    %v434 = vadd.f32 %v432, %v433
    %v435 = vrot.slane %v434, 1
    %v436 = vadd.f32 %v434, %v435
    %v437 = vrot.slane %v427, 4
    %v438 = vadd.f32 %v427, %v437
    %v439 = vrot.slane %v438, 2
    %v440 = vadd.f32 %v438, %v439
    %v441 = vrot.slane %v440, 1
    %v442 = vadd.f32 %v440, %v441
    %v443 = vmul.f32 %v436, 0.125
    %v444 = vmul.f32 %v442, 0.125
    %v445 = vmul.f32 %v425, %v425
    %v446 = vmul.f32 %v427, %v427
    %v447 = vrot.slane %v445, 4
    %v448 = vadd.f32 %v445, %v447
    %v449 = vrot.slane %v448, 2
    %v450 = vadd.f32 %v448, %v449
    %v451 = vrot.slane %v450, 1
    %v452 = vadd.f32 %v450, %v451
    %v453 = vrot.slane %v446, 4
    %v454 = vadd.f32 %v446, %v453
    %v455 = vrot.slane %v454, 2
    %v456 = vadd.f32 %v454, %v455
    %v457 = vrot.slane %v456, 1
    %v458 = vadd.f32 %v456, %v457
    %v459 = vmul.f32 %v452, 0.125
    %v460 = vmul.f32 %v458, 0.125
    %v461 = vmul.f32 %v443, %v443
    %v462 = vmul.f32 %v444, %v444
    %v463 = vsub.f32 %v459, %v461
    %v464 = vsub.f32 %v460, %v462
    %v465 = vmax.f32 %v463, 0.0
    %v466 = vmax.f32 %v464, 0.0
    %v467 = vsub.f32 %v425, %v443
    %v468 = vsub.f32 %v427, %v444
    %v469 = vadd.f32 %v465, 1e-05
    %v470 = vadd.f32 %v466, 1e-05
    %v471 = vrsqrt.pop %v469
    %v472 = vrsqrt.pop %v470
    %v473 = vmul.f32 %v467, %v471
    %v474 = vmul.f32 %v468, %v472
    %v475 = vmax.f32 %v473, 0.0
    %v476 = vmax.f32 %v474, 0.0
    %v477 = vpack.c.bf16 %v475, %v475
    %v478 = vpack.c.bf16 %v476, %v476
    %v511 = vunpack.c.l.b16 %v196
    %v512 = vunpack.c.h.b16 %v196
    %v513 = vunpack.c.l.b16 %v197
    %v514 = vunpack.c.h.b16 %v197
    %v515 = vunpack.c.l.b16 %v198
    %v516 = vunpack.c.h.b16 %v198
    %v517 = vunpack.c.l.b16 %v199
    %v518 = vunpack.c.h.b16 %v199
    %v519 = vunpack.c.l.b16 %v200
    %v520 = vunpack.c.h.b16 %v200
    %v521 = vunpack.c.l.b16 %v201
    %v522 = vunpack.c.h.b16 %v201
    %v523 = vunpack.c.l.b16 %v202
    %v524 = vunpack.c.h.b16 %v202
    %v525 = vunpack.c.l.b16 %v203
    %v526 = vunpack.c.h.b16 %v203
    %v527 = vunpack.c.l.b16 %v204
    %v528 = vunpack.c.h.b16 %v204
    %v529 = vunpack.c.l.b16 %v205
    %v530 = vunpack.c.h.b16 %v205
    %v531 = vunpack.c.l.b16 %v206
    %v532 = vunpack.c.h.b16 %v206
    %v533 = vunpack.c.l.b16 %v207
    %v534 = vunpack.c.h.b16 %v207
    %v535 = vunpack.c.l.b16 %v208
    %v536 = vunpack.c.h.b16 %v208
    %v537 = vunpack.c.l.b16 %v209
    %v538 = vunpack.c.h.b16 %v209
    %v539 = vunpack.c.l.b16 %v210
    %v540 = vunpack.c.h.b16 %v210
    %v541 = vunpack.c.l.b16 %v211
    %v542 = vunpack.c.h.b16 %v211
    %v543 = vunpack.c.l.b16 %v212
    %v544 = vunpack.c.h.b16 %v212
    %v545 = vunpack.c.l.b16 %v213
    %v546 = vunpack.c.h.b16 %v213
    %v547 = vunpack.c.l.b16 %v214
    %v548 = vunpack.c.h.b16 %v214
    %v549 = vunpack.c.l.b16 %v215
    %v550 = vunpack.c.h.b16 %v215
    %v551 = vunpack.c.l.b16 %v216
    %v552 = vunpack.c.h.b16 %v216
    %v553 = vunpack.c.l.b16 %v217
    %v554 = vunpack.c.h.b16 %v217
    %v555 = vunpack.c.l.b16 %v218
    %v556 = vunpack.c.h.b16 %v218
    %v557 = vunpack.c.l.b16 %v219
    %v558 = vunpack.c.h.b16 %v219
    %v559 = vunpack.c.l.b16 %v220
    %v560 = vunpack.c.h.b16 %v220
    %v561 = vunpack.c.l.b16 %v221
    %v562 = vunpack.c.h.b16 %v221
    %v563 = vunpack.c.l.b16 %v222
    %v564 = vunpack.c.h.b16 %v222
    %v565 = vunpack.c.l.b16 %v223
    %v566 = vunpack.c.h.b16 %v223
    %v567 = vunpack.c.l.b16 %v224
    %v568 = vunpack.c.h.b16 %v224
    %v569 = vunpack.c.l.b16 %v225
    %v570 = vunpack.c.h.b16 %v225
    %v571 = vunpack.c.l.b16 %v226
    %v572 = vunpack.c.h.b16 %v226
    %v573 = vunpack.c.l.b16 %v227
    %v574 = vunpack.c.h.b16 %v227
    %v575 = vpack.c.b16 %v513, %v511
    %v576 = vpack.c.b16 %v514, %v512
    %v577 = vpack.c.b16 %v517, %v515
    %v578 = vpack.c.b16 %v518, %v516
    %v579 = vpack.c.b16 %v521, %v519
    %v580 = vpack.c.b16 %v522, %v520
    %v581 = vpack.c.b16 %v525, %v523
    %v582 = vpack.c.b16 %v526, %v524
    %v583 = vpack.c.b16 %v529, %v527
    %v584 = vpack.c.b16 %v530, %v528
    %v585 = vpack.c.b16 %v533, %v531
    %v586 = vpack.c.b16 %v534, %v532
    %v587 = vpack.c.b16 %v537, %v535
    %v588 = vpack.c.b16 %v538, %v536
    %v589 = vpack.c.b16 %v541, %v539
    %v590 = vpack.c.b16 %v542, %v540
    %v591 = vpack.c.b16 %v545, %v543
    %v592 = vpack.c.b16 %v546, %v544
    %v593 = vpack.c.b16 %v549, %v547
    %v594 = vpack.c.b16 %v550, %v548
    %v595 = vpack.c.b16 %v553, %v551
    %v596 = vpack.c.b16 %v554, %v552
    %v597 = vpack.c.b16 %v557, %v555
    %v598 = vpack.c.b16 %v558, %v556
    %v599 = vpack.c.b16 %v561, %v559
    %v600 = vpack.c.b16 %v562, %v560
    %v601 = vpack.c.b16 %v565, %v563
    %v602 = vpack.c.b16 %v566, %v564
    %v603 = vpack.c.b16 %v569, %v567
    %v604 = vpack.c.b16 %v570, %v568
    %v605 = vpack.c.b16 %v573, %v571
    %v606 = vpack.c.b16 %v574, %v572
    %639 = vmatprep.subr.bf16.mxu0 %v590
    %640 = vmatpush1.bf16.msra.mxu0 %v589
    %641 = vmatprep.subr.bf16.mxu0 %v588
    %642 = vmatpush1.bf16.msra.mxu0 %v587
    %643 = vmatprep.subr.bf16.mxu0 %v586
    %644 = vmatpush1.bf16.msra.mxu0 %v585
    %645 = vmatprep.subr.bf16.mxu0 %v584
    %646 = vmatpush1.bf16.msra.mxu0 %v583
    %647 = vmatprep.subr.bf16.mxu0 %v582
    %648 = vmatpush1.bf16.msra.mxu0 %v581
    %649 = vmatprep.subr.bf16.mxu0 %v580
    %650 = vmatpush1.bf16.msra.mxu0 %v579
    %651 = vmatprep.subr.bf16.mxu0 %v578
    %652 = vmatpush1.bf16.msra.mxu0 %v577
    %653 = vmatprep.subr.bf16.mxu0 %v576
    %654 = vmatpush1.bf16.msra.mxu0 %v575
    %655 = vmatprep.subr.bf16.mxu0 %v606
    %656 = vmatpush2.bf16.msra.mxu0 %v605
    %657 = vmatprep.subr.bf16.mxu0 %v604
    %658 = vmatpush2.bf16.msra.mxu0 %v603
    %659 = vmatprep.subr.bf16.mxu0 %v602
    %660 = vmatpush2.bf16.msra.mxu0 %v601
    %661 = vmatprep.subr.bf16.mxu0 %v600
    %662 = vmatpush2.bf16.msra.mxu0 %v599
    %663 = vmatprep.subr.bf16.mxu0 %v598
    %664 = vmatpush2.bf16.msra.mxu0 %v597
    %665 = vmatprep.subr.bf16.mxu0 %v596
    %666 = vmatpush2.bf16.msra.mxu0 %v595
    %667 = vmatprep.subr.bf16.mxu0 %v594
    %668 = vmatpush2.bf16.msra.mxu0 %v593
    %669 = vmatprep.subr.bf16.mxu0 %v592
    %670 = vmatpush2.bf16.msra.mxu0 %v591
    %671 = vmatprep.mubr.bf16.mxu0 %v478
    %672 = vmatmul.mubr.bf16.gmra.mxu0 %v477
    %v673 = vpop.f32.mrf.mxu0
    %v674 = vadd.f32 0.0, %v673
    %v675 = vpop.f32.mrf.mxu0
    %v676 = vadd.f32 0.0, %v675
    %v677 = vpop.f32.mrf.mxu0
    %v678 = vpop.f32.mrf.mxu0
    %679 = vdwg.mxu0
    %v680 = vrot.slane %v674, 4
    %v681 = vadd.f32 %v674, %v680
    %v682 = vrot.slane %v681, 2
    %v683 = vadd.f32 %v681, %v682
    %v684 = vrot.slane %v683, 1
    %v685 = vadd.f32 %v683, %v684
    %v686 = vrot.slane %v676, 4
    %v687 = vadd.f32 %v676, %v686
    %v688 = vrot.slane %v687, 2
    %v689 = vadd.f32 %v687, %v688
    %v690 = vrot.slane %v689, 1
    %v691 = vadd.f32 %v689, %v690
    %v692 = vmul.f32 %v685, 0.125
    %v693 = vmul.f32 %v691, 0.125
    %v694 = vmul.f32 %v674, %v674
    %v695 = vmul.f32 %v676, %v676
    %v696 = vrot.slane %v694, 4
    %v697 = vadd.f32 %v694, %v696
    %v698 = vrot.slane %v697, 2
    %v699 = vadd.f32 %v697, %v698
    %v700 = vrot.slane %v699, 1
    %v701 = vadd.f32 %v699, %v700
    %v702 = vrot.slane %v695, 4
    %v703 = vadd.f32 %v695, %v702
    %v704 = vrot.slane %v703, 2
    %v705 = vadd.f32 %v703, %v704
    %v706 = vrot.slane %v705, 1
    %v707 = vadd.f32 %v705, %v706
    %v708 = vmul.f32 %v701, 0.125
    %v709 = vmul.f32 %v707, 0.125
    %v710 = vmul.f32 %v692, %v692
    %v711 = vmul.f32 %v693, %v693
    %v712 = vsub.f32 %v708, %v710
    %v713 = vsub.f32 %v709, %v711
    %v714 = vmax.f32 %v712, 0.0
    %v715 = vmax.f32 %v713, 0.0
    %v716 = vsub.f32 %v674, %v692
    %v717 = vsub.f32 %v676, %v693
    %v718 = vadd.f32 %v714, 1e-05
    %v719 = vadd.f32 %v715, 1e-05
    %v720 = vrsqrt.pop %v718
    %v721 = vrsqrt.pop %v719
    %v722 = vmul.f32 %v716, %v720
    %v723 = vmul.f32 %v717, %v721
    %v724 = vadd.f32 %v158, %v722
    %v725 = vadd.f32 %v160, %v723
    %v726 = vmax.f32 %v724, 0.0
    %v727 = vmax.f32 %v725, 0.0
    %s728 = smul.u32 4, 2
    %s729 = smul.u32 %s728, 32
    %s730 = smul.u32 %s729, 2
    %s731 = sshll.u32 %s730, 4
    %732 = dma.done [#allocation4], %s731
    %v733 = vld [vmem:[#allocation2] sm:$0xff]
    %v734 = vld [vmem:[#allocation2 + $0x8] sm:$0xff]
    %v735 = vld [vmem:[#allocation2 + $0x10] sm:$0xff]
    %v736 = vld [vmem:[#allocation2 + $0x18] sm:$0xff]
    %v737 = vld [vmem:[#allocation2 + $0x20] sm:$0xff]
    %v738 = vld [vmem:[#allocation2 + $0x28] sm:$0xff]
    %v739 = vld [vmem:[#allocation2 + $0x30] sm:$0xff]
    %v740 = vld [vmem:[#allocation2 + $0x38] sm:$0xff]
    %v741 = vld [vmem:[#allocation2 + $0x40] sm:$0xff]
    %v742 = vld [vmem:[#allocation2 + $0x48] sm:$0xff]
    %v743 = vld [vmem:[#allocation2 + $0x50] sm:$0xff]
    %v744 = vld [vmem:[#allocation2 + $0x58] sm:$0xff]
    %v745 = vld [vmem:[#allocation2 + $0x60] sm:$0xff]
    %v746 = vld [vmem:[#allocation2 + $0x68] sm:$0xff]
    %v747 = vld [vmem:[#allocation2 + $0x70] sm:$0xff]
    %v748 = vld [vmem:[#allocation2 + $0x78] sm:$0xff]
    %v749 = vld [vmem:[#allocation2 + $0x80] sm:$0xff]
    %v750 = vld [vmem:[#allocation2 + $0x88] sm:$0xff]
    %v751 = vld [vmem:[#allocation2 + $0x90] sm:$0xff]
    %v752 = vld [vmem:[#allocation2 + $0x98] sm:$0xff]
    %v753 = vld [vmem:[#allocation2 + $0xa0] sm:$0xff]
    %v754 = vld [vmem:[#allocation2 + $0xa8] sm:$0xff]
    %v755 = vld [vmem:[#allocation2 + $0xb0] sm:$0xff]
    %v756 = vld [vmem:[#allocation2 + $0xb8] sm:$0xff]
    %v757 = vld [vmem:[#allocation2 + $0xc0] sm:$0xff]
    %v758 = vld [vmem:[#allocation2 + $0xc8] sm:$0xff]
    %v759 = vld [vmem:[#allocation2 + $0xd0] sm:$0xff]
    %v760 = vld [vmem:[#allocation2 + $0xd8] sm:$0xff]
    %v761 = vld [vmem:[#allocation2 + $0xe0] sm:$0xff]
    %v762 = vld [vmem:[#allocation2 + $0xe8] sm:$0xff]
    %v763 = vld [vmem:[#allocation2 + $0xf0] sm:$0xff]
    %v764 = vld [vmem:[#allocation2 + $0xf8] sm:$0xff]
    %s765 = scalar_lea.vmem [#allocation2], 256
    %v766 = vld [vmem:[%s765] sm:$0xff]
    %v767 = vld [vmem:[%s765 + $0x8] sm:$0xff]
    %v768 = vld [vmem:[%s765 + $0x10] sm:$0xff]
    %v769 = vld [vmem:[%s765 + $0x18] sm:$0xff]
    %v770 = vld [vmem:[%s765 + $0x20] sm:$0xff]
    %v771 = vld [vmem:[%s765 + $0x28] sm:$0xff]
    %v772 = vld [vmem:[%s765 + $0x30] sm:$0xff]
    %v773 = vld [vmem:[%s765 + $0x38] sm:$0xff]
    %v774 = vld [vmem:[%s765 + $0x40] sm:$0xff]
    %v775 = vld [vmem:[%s765 + $0x48] sm:$0xff]
    %v776 = vld [vmem:[%s765 + $0x50] sm:$0xff]
    %v777 = vld [vmem:[%s765 + $0x58] sm:$0xff]
    %v778 = vld [vmem:[%s765 + $0x60] sm:$0xff]
    %v779 = vld [vmem:[%s765 + $0x68] sm:$0xff]
    %v780 = vld [vmem:[%s765 + $0x70] sm:$0xff]
    %v781 = vld [vmem:[%s765 + $0x78] sm:$0xff]
    %v782 = vld [vmem:[%s765 + $0x80] sm:$0xff]
    %v783 = vld [vmem:[%s765 + $0x88] sm:$0xff]
    %v784 = vld [vmem:[%s765 + $0x90] sm:$0xff]
    %v785 = vld [vmem:[%s765 + $0x98] sm:$0xff]
    %v786 = vld [vmem:[%s765 + $0xa0] sm:$0xff]
    %v787 = vld [vmem:[%s765 + $0xa8] sm:$0xff]
    %v788 = vld [vmem:[%s765 + $0xb0] sm:$0xff]
    %v789 = vld [vmem:[%s765 + $0xb8] sm:$0xff]
    %v790 = vld [vmem:[%s765 + $0xc0] sm:$0xff]
    %v791 = vld [vmem:[%s765 + $0xc8] sm:$0xff]
    %v792 = vld [vmem:[%s765 + $0xd0] sm:$0xff]
    %v793 = vld [vmem:[%s765 + $0xd8] sm:$0xff]
    %v794 = vld [vmem:[%s765 + $0xe0] sm:$0xff]
    %v795 = vld [vmem:[%s765 + $0xe8] sm:$0xff]
    %v796 = vld [vmem:[%s765 + $0xf0] sm:$0xff]
    %v797 = vld [vmem:[%s765 + $0xf8] sm:$0xff]
    %v798 = vpack.c.bf16 %v726, %v726
    %v799 = vpack.c.bf16 %v727, %v727
    %v832 = vunpack.c.l.b16 %v733
    %v833 = vunpack.c.h.b16 %v733
    %v834 = vunpack.c.l.b16 %v734
    %v835 = vunpack.c.h.b16 %v734
    %v836 = vunpack.c.l.b16 %v735
    %v837 = vunpack.c.h.b16 %v735
    %v838 = vunpack.c.l.b16 %v736
    %v839 = vunpack.c.h.b16 %v736
    %v840 = vunpack.c.l.b16 %v737
    %v841 = vunpack.c.h.b16 %v737
    %v842 = vunpack.c.l.b16 %v738
    %v843 = vunpack.c.h.b16 %v738
    %v844 = vunpack.c.l.b16 %v739
    %v845 = vunpack.c.h.b16 %v739
    %v846 = vunpack.c.l.b16 %v740
    %v847 = vunpack.c.h.b16 %v740
    %v848 = vunpack.c.l.b16 %v741
    %v849 = vunpack.c.h.b16 %v741
    %v850 = vunpack.c.l.b16 %v742
    %v851 = vunpack.c.h.b16 %v742
    %v852 = vunpack.c.l.b16 %v743
    %v853 = vunpack.c.h.b16 %v743
    %v854 = vunpack.c.l.b16 %v744
    %v855 = vunpack.c.h.b16 %v744
    %v856 = vunpack.c.l.b16 %v745
    %v857 = vunpack.c.h.b16 %v745
    %v858 = vunpack.c.l.b16 %v746
    %v859 = vunpack.c.h.b16 %v746
    %v860 = vunpack.c.l.b16 %v747
    %v861 = vunpack.c.h.b16 %v747
    %v862 = vunpack.c.l.b16 %v748
    %v863 = vunpack.c.h.b16 %v748
    %v864 = vunpack.c.l.b16 %v749
    %v865 = vunpack.c.h.b16 %v749
    %v866 = vunpack.c.l.b16 %v750
    %v867 = vunpack.c.h.b16 %v750
    %v868 = vunpack.c.l.b16 %v751
    %v869 = vunpack.c.h.b16 %v751
    %v870 = vunpack.c.l.b16 %v752
    %v871 = vunpack.c.h.b16 %v752
    %v872 = vunpack.c.l.b16 %v753
    %v873 = vunpack.c.h.b16 %v753
    %v874 = vunpack.c.l.b16 %v754
    %v875 = vunpack.c.h.b16 %v754
    %v876 = vunpack.c.l.b16 %v755
    %v877 = vunpack.c.h.b16 %v755
    %v878 = vunpack.c.l.b16 %v756
    %v879 = vunpack.c.h.b16 %v756
    %v880 = vunpack.c.l.b16 %v757
    %v881 = vunpack.c.h.b16 %v757
    %v882 = vunpack.c.l.b16 %v758
    %v883 = vunpack.c.h.b16 %v758
    %v884 = vunpack.c.l.b16 %v759
    %v885 = vunpack.c.h.b16 %v759
    %v886 = vunpack.c.l.b16 %v760
    %v887 = vunpack.c.h.b16 %v760
    %v888 = vunpack.c.l.b16 %v761
    %v889 = vunpack.c.h.b16 %v761
    %v890 = vunpack.c.l.b16 %v762
    %v891 = vunpack.c.h.b16 %v762
    %v892 = vunpack.c.l.b16 %v763
    %v893 = vunpack.c.h.b16 %v763
    %v894 = vunpack.c.l.b16 %v764
    %v895 = vunpack.c.h.b16 %v764
    %v896 = vpack.c.b16 %v834, %v832
    %v897 = vpack.c.b16 %v835, %v833
    %v898 = vpack.c.b16 %v838, %v836
    %v899 = vpack.c.b16 %v839, %v837
    %v900 = vpack.c.b16 %v842, %v840
    %v901 = vpack.c.b16 %v843, %v841
    %v902 = vpack.c.b16 %v846, %v844
    %v903 = vpack.c.b16 %v847, %v845
    %v904 = vpack.c.b16 %v850, %v848
    %v905 = vpack.c.b16 %v851, %v849
    %v906 = vpack.c.b16 %v854, %v852
    %v907 = vpack.c.b16 %v855, %v853
    %v908 = vpack.c.b16 %v858, %v856
    %v909 = vpack.c.b16 %v859, %v857
    %v910 = vpack.c.b16 %v862, %v860
    %v911 = vpack.c.b16 %v863, %v861
    %v912 = vpack.c.b16 %v866, %v864
    %v913 = vpack.c.b16 %v867, %v865
    %v914 = vpack.c.b16 %v870, %v868
    %v915 = vpack.c.b16 %v871, %v869
    %v916 = vpack.c.b16 %v874, %v872
    %v917 = vpack.c.b16 %v875, %v873
    %v918 = vpack.c.b16 %v878, %v876
    %v919 = vpack.c.b16 %v879, %v877
    %v920 = vpack.c.b16 %v882, %v880
    %v921 = vpack.c.b16 %v883, %v881
    %v922 = vpack.c.b16 %v886, %v884
    %v923 = vpack.c.b16 %v887, %v885
    %v924 = vpack.c.b16 %v890, %v888
    %v925 = vpack.c.b16 %v891, %v889
    %v926 = vpack.c.b16 %v894, %v892
    %v927 = vpack.c.b16 %v895, %v893
    %960 = vmatprep.subr.bf16.mxu0 %v911
    %961 = vmatpush1.bf16.msra.mxu0 %v910
    %962 = vmatprep.subr.bf16.mxu0 %v909
    %963 = vmatpush1.bf16.msra.mxu0 %v908
    %964 = vmatprep.subr.bf16.mxu0 %v907
    %965 = vmatpush1.bf16.msra.mxu0 %v906
    %966 = vmatprep.subr.bf16.mxu0 %v905
    %967 = vmatpush1.bf16.msra.mxu0 %v904
    %968 = vmatprep.subr.bf16.mxu0 %v903
    %969 = vmatpush1.bf16.msra.mxu0 %v902
    %970 = vmatprep.subr.bf16.mxu0 %v901
    %971 = vmatpush1.bf16.msra.mxu0 %v900
    %972 = vmatprep.subr.bf16.mxu0 %v899
    %973 = vmatpush1.bf16.msra.mxu0 %v898
    %974 = vmatprep.subr.bf16.mxu0 %v897
    %975 = vmatpush1.bf16.msra.mxu0 %v896
    %976 = vmatprep.subr.bf16.mxu0 %v927
    %977 = vmatpush2.bf16.msra.mxu0 %v926
    %978 = vmatprep.subr.bf16.mxu0 %v925
    %979 = vmatpush2.bf16.msra.mxu0 %v924
    %980 = vmatprep.subr.bf16.mxu0 %v923
    %981 = vmatpush2.bf16.msra.mxu0 %v922
    %982 = vmatprep.subr.bf16.mxu0 %v921
    %983 = vmatpush2.bf16.msra.mxu0 %v920
    %984 = vmatprep.subr.bf16.mxu0 %v919
    %985 = vmatpush2.bf16.msra.mxu0 %v918
    %986 = vmatprep.subr.bf16.mxu0 %v917
    %987 = vmatpush2.bf16.msra.mxu0 %v916
    %988 = vmatprep.subr.bf16.mxu0 %v915
    %989 = vmatpush2.bf16.msra.mxu0 %v914
    %990 = vmatprep.subr.bf16.mxu0 %v913
    %991 = vmatpush2.bf16.msra.mxu0 %v912
    %992 = vmatprep.mubr.bf16.mxu0 %v799
    %993 = vmatmul.mubr.bf16.gmra.mxu0 %v798
    %v994 = vpop.f32.mrf.mxu0
    %v995 = vadd.f32 0.0, %v994
    %v996 = vpop.f32.mrf.mxu0
    %v997 = vadd.f32 0.0, %v996
    %v998 = vpop.f32.mrf.mxu0
    %v999 = vpop.f32.mrf.mxu0
    %1000 = vdwg.mxu0
    %v1001 = vrot.slane %v995, 4
    %v1002 = vadd.f32 %v995, %v1001
    %v1003 = vrot.slane %v1002, 2
    %v1004 = vadd.f32 %v1002, %v1003
    %v1005 = vrot.slane %v1004, 1
    %v1006 = vadd.f32 %v1004, %v1005
    %v1007 = vrot.slane %v997, 4
    %v1008 = vadd.f32 %v997, %v1007
    %v1009 = vrot.slane %v1008, 2
    %v1010 = vadd.f32 %v1008, %v1009
    %v1011 = vrot.slane %v1010, 1
    %v1012 = vadd.f32 %v1010, %v1011
    %v1013 = vmul.f32 %v1006, 0.125
    %v1014 = vmul.f32 %v1012, 0.125
    %v1015 = vmul.f32 %v995, %v995
    %v1016 = vmul.f32 %v997, %v997
    %v1017 = vrot.slane %v1015, 4
    %v1018 = vadd.f32 %v1015, %v1017
    %v1019 = vrot.slane %v1018, 2
    %v1020 = vadd.f32 %v1018, %v1019
    %v1021 = vrot.slane %v1020, 1
    %v1022 = vadd.f32 %v1020, %v1021
    %v1023 = vrot.slane %v1016, 4
    %v1024 = vadd.f32 %v1016, %v1023
    %v1025 = vrot.slane %v1024, 2
    %v1026 = vadd.f32 %v1024, %v1025
    %v1027 = vrot.slane %v1026, 1
    %v1028 = vadd.f32 %v1026, %v1027
    %v1029 = vmul.f32 %v1022, 0.125
    %v1030 = vmul.f32 %v1028, 0.125
    %v1031 = vmul.f32 %v1013, %v1013
    %v1032 = vmul.f32 %v1014, %v1014
    %v1033 = vsub.f32 %v1029, %v1031
    %v1034 = vsub.f32 %v1030, %v1032
    %v1035 = vmax.f32 %v1033, 0.0
    %v1036 = vmax.f32 %v1034, 0.0
    %v1037 = vsub.f32 %v995, %v1013
    %v1038 = vsub.f32 %v997, %v1014
    %v1039 = vadd.f32 %v1035, 1e-05
    %v1040 = vadd.f32 %v1036, 1e-05
    %v1041 = vrsqrt.pop %v1039
    %v1042 = vrsqrt.pop %v1040
    %v1043 = vmul.f32 %v1037, %v1041
    %v1044 = vmul.f32 %v1038, %v1042
    %v1045 = vmax.f32 %v1043, 0.0
    %v1046 = vmax.f32 %v1044, 0.0
    %v1047 = vpack.c.bf16 %v1045, %v1045
    %v1048 = vpack.c.bf16 %v1046, %v1046
    %v1081 = vunpack.c.l.b16 %v766
    %v1082 = vunpack.c.h.b16 %v766
    %v1083 = vunpack.c.l.b16 %v767
    %v1084 = vunpack.c.h.b16 %v767
    %v1085 = vunpack.c.l.b16 %v768
    %v1086 = vunpack.c.h.b16 %v768
    %v1087 = vunpack.c.l.b16 %v769
    %v1088 = vunpack.c.h.b16 %v769
    %v1089 = vunpack.c.l.b16 %v770
    %v1090 = vunpack.c.h.b16 %v770
    %v1091 = vunpack.c.l.b16 %v771
    %v1092 = vunpack.c.h.b16 %v771
    %v1093 = vunpack.c.l.b16 %v772
    %v1094 = vunpack.c.h.b16 %v772
    %v1095 = vunpack.c.l.b16 %v773
    %v1096 = vunpack.c.h.b16 %v773
    %v1097 = vunpack.c.l.b16 %v774
    %v1098 = vunpack.c.h.b16 %v774
    %v1099 = vunpack.c.l.b16 %v775
    %v1100 = vunpack.c.h.b16 %v775
    %v1101 = vunpack.c.l.b16 %v776
    %v1102 = vunpack.c.h.b16 %v776
    %v1103 = vunpack.c.l.b16 %v777
    %v1104 = vunpack.c.h.b16 %v777
    %v1105 = vunpack.c.l.b16 %v778
    %v1106 = vunpack.c.h.b16 %v778
    %v1107 = vunpack.c.l.b16 %v779
    %v1108 = vunpack.c.h.b16 %v779
    %v1109 = vunpack.c.l.b16 %v780
    %v1110 = vunpack.c.h.b16 %v780
    %v1111 = vunpack.c.l.b16 %v781
    %v1112 = vunpack.c.h.b16 %v781
    %v1113 = vunpack.c.l.b16 %v782
    %v1114 = vunpack.c.h.b16 %v782
    %v1115 = vunpack.c.l.b16 %v783
    %v1116 = vunpack.c.h.b16 %v783
    %v1117 = vunpack.c.l.b16 %v784
    %v1118 = vunpack.c.h.b16 %v784
    %v1119 = vunpack.c.l.b16 %v785
    %v1120 = vunpack.c.h.b16 %v785
    %v1121 = vunpack.c.l.b16 %v786
    %v1122 = vunpack.c.h.b16 %v786
    %v1123 = vunpack.c.l.b16 %v787
    %v1124 = vunpack.c.h.b16 %v787
    %v1125 = vunpack.c.l.b16 %v788
    %v1126 = vunpack.c.h.b16 %v788
    %v1127 = vunpack.c.l.b16 %v789
    %v1128 = vunpack.c.h.b16 %v789
    %v1129 = vunpack.c.l.b16 %v790
    %v1130 = vunpack.c.h.b16 %v790
    %v1131 = vunpack.c.l.b16 %v791
    %v1132 = vunpack.c.h.b16 %v791
    %v1133 = vunpack.c.l.b16 %v792
    %v1134 = vunpack.c.h.b16 %v792
    %v1135 = vunpack.c.l.b16 %v793
    %v1136 = vunpack.c.h.b16 %v793
    %v1137 = vunpack.c.l.b16 %v794
    %v1138 = vunpack.c.h.b16 %v794
    %v1139 = vunpack.c.l.b16 %v795
    %v1140 = vunpack.c.h.b16 %v795
    %v1141 = vunpack.c.l.b16 %v796
    %v1142 = vunpack.c.h.b16 %v796
    %v1143 = vunpack.c.l.b16 %v797
    %v1144 = vunpack.c.h.b16 %v797
    %v1145 = vpack.c.b16 %v1083, %v1081
    %v1146 = vpack.c.b16 %v1084, %v1082
    %v1147 = vpack.c.b16 %v1087, %v1085
    %v1148 = vpack.c.b16 %v1088, %v1086
    %v1149 = vpack.c.b16 %v1091, %v1089
    %v1150 = vpack.c.b16 %v1092, %v1090
    %v1151 = vpack.c.b16 %v1095, %v1093
    %v1152 = vpack.c.b16 %v1096, %v1094
    %v1153 = vpack.c.b16 %v1099, %v1097
    %v1154 = vpack.c.b16 %v1100, %v1098
    %v1155 = vpack.c.b16 %v1103, %v1101
    %v1156 = vpack.c.b16 %v1104, %v1102
    %v1157 = vpack.c.b16 %v1107, %v1105
    %v1158 = vpack.c.b16 %v1108, %v1106
    %v1159 = vpack.c.b16 %v1111, %v1109
    %v1160 = vpack.c.b16 %v1112, %v1110
    %v1161 = vpack.c.b16 %v1115, %v1113
    %v1162 = vpack.c.b16 %v1116, %v1114
    %v1163 = vpack.c.b16 %v1119, %v1117
    %v1164 = vpack.c.b16 %v1120, %v1118
    %v1165 = vpack.c.b16 %v1123, %v1121
    %v1166 = vpack.c.b16 %v1124, %v1122
    %v1167 = vpack.c.b16 %v1127, %v1125
    %v1168 = vpack.c.b16 %v1128, %v1126
    %v1169 = vpack.c.b16 %v1131, %v1129
    %v1170 = vpack.c.b16 %v1132, %v1130
    %v1171 = vpack.c.b16 %v1135, %v1133
    %v1172 = vpack.c.b16 %v1136, %v1134
    %v1173 = vpack.c.b16 %v1139, %v1137
    %v1174 = vpack.c.b16 %v1140, %v1138
    %v1175 = vpack.c.b16 %v1143, %v1141
    %v1176 = vpack.c.b16 %v1144, %v1142
    %1209 = vmatprep.subr.bf16.mxu0 %v1160
    %1210 = vmatpush1.bf16.msra.mxu0 %v1159
    %1211 = vmatprep.subr.bf16.mxu0 %v1158
    %1212 = vmatpush1.bf16.msra.mxu0 %v1157
    %1213 = vmatprep.subr.bf16.mxu0 %v1156
    %1214 = vmatpush1.bf16.msra.mxu0 %v1155
    %1215 = vmatprep.subr.bf16.mxu0 %v1154
    %1216 = vmatpush1.bf16.msra.mxu0 %v1153
    %1217 = vmatprep.subr.bf16.mxu0 %v1152
    %1218 = vmatpush1.bf16.msra.mxu0 %v1151
    %1219 = vmatprep.subr.bf16.mxu0 %v1150
    %1220 = vmatpush1.bf16.msra.mxu0 %v1149
    %1221 = vmatprep.subr.bf16.mxu0 %v1148
    %1222 = vmatpush1.bf16.msra.mxu0 %v1147
    %1223 = vmatprep.subr.bf16.mxu0 %v1146
    %1224 = vmatpush1.bf16.msra.mxu0 %v1145
    %1225 = vmatprep.subr.bf16.mxu0 %v1176
    %1226 = vmatpush2.bf16.msra.mxu0 %v1175
    %1227 = vmatprep.subr.bf16.mxu0 %v1174
    %1228 = vmatpush2.bf16.msra.mxu0 %v1173
    %1229 = vmatprep.subr.bf16.mxu0 %v1172
    %1230 = vmatpush2.bf16.msra.mxu0 %v1171
    %1231 = vmatprep.subr.bf16.mxu0 %v1170
    %1232 = vmatpush2.bf16.msra.mxu0 %v1169
    %1233 = vmatprep.subr.bf16.mxu0 %v1168
    %1234 = vmatpush2.bf16.msra.mxu0 %v1167
    %1235 = vmatprep.subr.bf16.mxu0 %v1166
    %1236 = vmatpush2.bf16.msra.mxu0 %v1165
    %1237 = vmatprep.subr.bf16.mxu0 %v1164
    %1238 = vmatpush2.bf16.msra.mxu0 %v1163
    %1239 = vmatprep.subr.bf16.mxu0 %v1162
    %1240 = vmatpush2.bf16.msra.mxu0 %v1161
    %1241 = vmatprep.mubr.bf16.mxu0 %v1048
    %1242 = vmatmul.mubr.bf16.gmra.mxu0 %v1047
    %v1243 = vpop.f32.mrf.mxu0
    %v1244 = vadd.f32 0.0, %v1243
    %v1245 = vpop.f32.mrf.mxu0
    %v1246 = vadd.f32 0.0, %v1245
    %v1247 = vpop.f32.mrf.mxu0
    %v1248 = vpop.f32.mrf.mxu0
    %1249 = vdwg.mxu0
    %v1250 = vrot.slane %v1244, 4
    %v1251 = vadd.f32 %v1244, %v1250
    %v1252 = vrot.slane %v1251, 2
    %v1253 = vadd.f32 %v1251, %v1252
    %v1254 = vrot.slane %v1253, 1
    %v1255 = vadd.f32 %v1253, %v1254
    %v1256 = vrot.slane %v1246, 4
    %v1257 = vadd.f32 %v1246, %v1256
    %v1258 = vrot.slane %v1257, 2
    %v1259 = vadd.f32 %v1257, %v1258
    %v1260 = vrot.slane %v1259, 1
    %v1261 = vadd.f32 %v1259, %v1260
    %v1262 = vmul.f32 %v1255, 0.125
    %v1263 = vmul.f32 %v1261, 0.125
    %v1264 = vmul.f32 %v1244, %v1244
    %v1265 = vmul.f32 %v1246, %v1246
    %v1266 = vrot.slane %v1264, 4
    %v1267 = vadd.f32 %v1264, %v1266
    %v1268 = vrot.slane %v1267, 2
    %v1269 = vadd.f32 %v1267, %v1268
    %v1270 = vrot.slane %v1269, 1
    %v1271 = vadd.f32 %v1269, %v1270
    %v1272 = vrot.slane %v1265, 4
    %v1273 = vadd.f32 %v1265, %v1272
    %v1274 = vrot.slane %v1273, 2
    %v1275 = vadd.f32 %v1273, %v1274
    %v1276 = vrot.slane %v1275, 1
    %v1277 = vadd.f32 %v1275, %v1276
    %v1278 = vmul.f32 %v1271, 0.125
    %v1279 = vmul.f32 %v1277, 0.125
    %v1280 = vmul.f32 %v1262, %v1262
    %v1281 = vmul.f32 %v1263, %v1263
    %v1282 = vsub.f32 %v1278, %v1280
    %v1283 = vsub.f32 %v1279, %v1281
    %v1284 = vmax.f32 %v1282, 0.0
    %v1285 = vmax.f32 %v1283, 0.0
    %v1286 = vsub.f32 %v1244, %v1262
    %v1287 = vsub.f32 %v1246, %v1263
    %v1288 = vadd.f32 %v1284, 1e-05
    %v1289 = vadd.f32 %v1285, 1e-05
    %v1290 = vrsqrt.pop %v1288
    %v1291 = vrsqrt.pop %v1289
    %v1292 = vmul.f32 %v1286, %v1290
    %v1293 = vmul.f32 %v1287, %v1291
    %v1294 = vadd.f32 %v726, %v1292
    %v1295 = vadd.f32 %v727, %v1293
    %v1296 = vmax.f32 %v1294, 0.0
    %v1297 = vmax.f32 %v1295, 0.0
    %s1298 = sshll.u32 %s730, 4
    %1299 = dma.done %s57, %s1298
    %v1300 = vld [vmem:[%s56] sm:$0xff]
    %v1301 = vld [vmem:[%s56 + $0x8] sm:$0xff]
    %v1302 = vld [vmem:[%s56 + $0x10] sm:$0xff]
    %v1303 = vld [vmem:[%s56 + $0x18] sm:$0xff]
    %v1304 = vld [vmem:[%s56 + $0x20] sm:$0xff]
    %v1305 = vld [vmem:[%s56 + $0x28] sm:$0xff]
    %v1306 = vld [vmem:[%s56 + $0x30] sm:$0xff]
    %v1307 = vld [vmem:[%s56 + $0x38] sm:$0xff]
    %v1308 = vld [vmem:[%s56 + $0x40] sm:$0xff]
    %v1309 = vld [vmem:[%s56 + $0x48] sm:$0xff]
    %v1310 = vld [vmem:[%s56 + $0x50] sm:$0xff]
    %v1311 = vld [vmem:[%s56 + $0x58] sm:$0xff]
    %v1312 = vld [vmem:[%s56 + $0x60] sm:$0xff]
    %v1313 = vld [vmem:[%s56 + $0x68] sm:$0xff]
    %v1314 = vld [vmem:[%s56 + $0x70] sm:$0xff]
    %v1315 = vld [vmem:[%s56 + $0x78] sm:$0xff]
    %v1316 = vld [vmem:[%s56 + $0x80] sm:$0xff]
    %v1317 = vld [vmem:[%s56 + $0x88] sm:$0xff]
    %v1318 = vld [vmem:[%s56 + $0x90] sm:$0xff]
    %v1319 = vld [vmem:[%s56 + $0x98] sm:$0xff]
    %v1320 = vld [vmem:[%s56 + $0xa0] sm:$0xff]
    %v1321 = vld [vmem:[%s56 + $0xa8] sm:$0xff]
    %v1322 = vld [vmem:[%s56 + $0xb0] sm:$0xff]
    %v1323 = vld [vmem:[%s56 + $0xb8] sm:$0xff]
    %v1324 = vld [vmem:[%s56 + $0xc0] sm:$0xff]
    %v1325 = vld [vmem:[%s56 + $0xc8] sm:$0xff]
    %v1326 = vld [vmem:[%s56 + $0xd0] sm:$0xff]
    %v1327 = vld [vmem:[%s56 + $0xd8] sm:$0xff]
    %v1328 = vld [vmem:[%s56 + $0xe0] sm:$0xff]
    %v1329 = vld [vmem:[%s56 + $0xe8] sm:$0xff]
    %v1330 = vld [vmem:[%s56 + $0xf0] sm:$0xff]
    %v1331 = vld [vmem:[%s56 + $0xf8] sm:$0xff]
    %s1332 = scalar_lea.vmem [#allocation2], 768
    %v1333 = vld [vmem:[%s1332] sm:$0xff]
    %v1334 = vld [vmem:[%s1332 + $0x8] sm:$0xff]
    %v1335 = vld [vmem:[%s1332 + $0x10] sm:$0xff]
    %v1336 = vld [vmem:[%s1332 + $0x18] sm:$0xff]
    %v1337 = vld [vmem:[%s1332 + $0x20] sm:$0xff]
    %v1338 = vld [vmem:[%s1332 + $0x28] sm:$0xff]
    %v1339 = vld [vmem:[%s1332 + $0x30] sm:$0xff]
    %v1340 = vld [vmem:[%s1332 + $0x38] sm:$0xff]
    %v1341 = vld [vmem:[%s1332 + $0x40] sm:$0xff]
    %v1342 = vld [vmem:[%s1332 + $0x48] sm:$0xff]
    %v1343 = vld [vmem:[%s1332 + $0x50] sm:$0xff]
    %v1344 = vld [vmem:[%s1332 + $0x58] sm:$0xff]
    %v1345 = vld [vmem:[%s1332 + $0x60] sm:$0xff]
    %v1346 = vld [vmem:[%s1332 + $0x68] sm:$0xff]
    %v1347 = vld [vmem:[%s1332 + $0x70] sm:$0xff]
    %v1348 = vld [vmem:[%s1332 + $0x78] sm:$0xff]
    %v1349 = vld [vmem:[%s1332 + $0x80] sm:$0xff]
    %v1350 = vld [vmem:[%s1332 + $0x88] sm:$0xff]
    %v1351 = vld [vmem:[%s1332 + $0x90] sm:$0xff]
    %v1352 = vld [vmem:[%s1332 + $0x98] sm:$0xff]
    %v1353 = vld [vmem:[%s1332 + $0xa0] sm:$0xff]
    %v1354 = vld [vmem:[%s1332 + $0xa8] sm:$0xff]
    %v1355 = vld [vmem:[%s1332 + $0xb0] sm:$0xff]
    %v1356 = vld [vmem:[%s1332 + $0xb8] sm:$0xff]
    %v1357 = vld [vmem:[%s1332 + $0xc0] sm:$0xff]
    %v1358 = vld [vmem:[%s1332 + $0xc8] sm:$0xff]
    %v1359 = vld [vmem:[%s1332 + $0xd0] sm:$0xff]
    %v1360 = vld [vmem:[%s1332 + $0xd8] sm:$0xff]
    %v1361 = vld [vmem:[%s1332 + $0xe0] sm:$0xff]
    %v1362 = vld [vmem:[%s1332 + $0xe8] sm:$0xff]
    %v1363 = vld [vmem:[%s1332 + $0xf0] sm:$0xff]
    %v1364 = vld [vmem:[%s1332 + $0xf8] sm:$0xff]
    %v1365 = vpack.c.bf16 %v1296, %v1296
    %v1366 = vpack.c.bf16 %v1297, %v1297
    %v1399 = vunpack.c.l.b16 %v1300
    %v1400 = vunpack.c.h.b16 %v1300
    %v1401 = vunpack.c.l.b16 %v1301
    %v1402 = vunpack.c.h.b16 %v1301
    %v1403 = vunpack.c.l.b16 %v1302
    %v1404 = vunpack.c.h.b16 %v1302
    %v1405 = vunpack.c.l.b16 %v1303
    %v1406 = vunpack.c.h.b16 %v1303
    %v1407 = vunpack.c.l.b16 %v1304
    %v1408 = vunpack.c.h.b16 %v1304
    %v1409 = vunpack.c.l.b16 %v1305
    %v1410 = vunpack.c.h.b16 %v1305
    %v1411 = vunpack.c.l.b16 %v1306
    %v1412 = vunpack.c.h.b16 %v1306
    %v1413 = vunpack.c.l.b16 %v1307
    %v1414 = vunpack.c.h.b16 %v1307
    %v1415 = vunpack.c.l.b16 %v1308
    %v1416 = vunpack.c.h.b16 %v1308
    %v1417 = vunpack.c.l.b16 %v1309
    %v1418 = vunpack.c.h.b16 %v1309
    %v1419 = vunpack.c.l.b16 %v1310
    %v1420 = vunpack.c.h.b16 %v1310
    %v1421 = vunpack.c.l.b16 %v1311
    %v1422 = vunpack.c.h.b16 %v1311
    %v1423 = vunpack.c.l.b16 %v1312
    %v1424 = vunpack.c.h.b16 %v1312
    %v1425 = vunpack.c.l.b16 %v1313
    %v1426 = vunpack.c.h.b16 %v1313
    %v1427 = vunpack.c.l.b16 %v1314
    %v1428 = vunpack.c.h.b16 %v1314
    %v1429 = vunpack.c.l.b16 %v1315
    %v1430 = vunpack.c.h.b16 %v1315
    %v1431 = vunpack.c.l.b16 %v1316
    %v1432 = vunpack.c.h.b16 %v1316
    %v1433 = vunpack.c.l.b16 %v1317
    %v1434 = vunpack.c.h.b16 %v1317
    %v1435 = vunpack.c.l.b16 %v1318
    %v1436 = vunpack.c.h.b16 %v1318
    %v1437 = vunpack.c.l.b16 %v1319
    %v1438 = vunpack.c.h.b16 %v1319
    %v1439 = vunpack.c.l.b16 %v1320
    %v1440 = vunpack.c.h.b16 %v1320
    %v1441 = vunpack.c.l.b16 %v1321
    %v1442 = vunpack.c.h.b16 %v1321
    %v1443 = vunpack.c.l.b16 %v1322
    %v1444 = vunpack.c.h.b16 %v1322
    %v1445 = vunpack.c.l.b16 %v1323
    %v1446 = vunpack.c.h.b16 %v1323
    %v1447 = vunpack.c.l.b16 %v1324
    %v1448 = vunpack.c.h.b16 %v1324
    %v1449 = vunpack.c.l.b16 %v1325
    %v1450 = vunpack.c.h.b16 %v1325
    %v1451 = vunpack.c.l.b16 %v1326
    %v1452 = vunpack.c.h.b16 %v1326
    %v1453 = vunpack.c.l.b16 %v1327
    %v1454 = vunpack.c.h.b16 %v1327
    %v1455 = vunpack.c.l.b16 %v1328
    %v1456 = vunpack.c.h.b16 %v1328
    %v1457 = vunpack.c.l.b16 %v1329
    %v1458 = vunpack.c.h.b16 %v1329
    %v1459 = vunpack.c.l.b16 %v1330
    %v1460 = vunpack.c.h.b16 %v1330
    %v1461 = vunpack.c.l.b16 %v1331
    %v1462 = vunpack.c.h.b16 %v1331
    %v1463 = vpack.c.b16 %v1401, %v1399
    %v1464 = vpack.c.b16 %v1402, %v1400
    %v1465 = vpack.c.b16 %v1405, %v1403
    %v1466 = vpack.c.b16 %v1406, %v1404
    %v1467 = vpack.c.b16 %v1409, %v1407
    %v1468 = vpack.c.b16 %v1410, %v1408
    %v1469 = vpack.c.b16 %v1413, %v1411
    %v1470 = vpack.c.b16 %v1414, %v1412
    %v1471 = vpack.c.b16 %v1417, %v1415
    %v1472 = vpack.c.b16 %v1418, %v1416
    %v1473 = vpack.c.b16 %v1421, %v1419
    %v1474 = vpack.c.b16 %v1422, %v1420
    %v1475 = vpack.c.b16 %v1425, %v1423
    %v1476 = vpack.c.b16 %v1426, %v1424
    %v1477 = vpack.c.b16 %v1429, %v1427
    %v1478 = vpack.c.b16 %v1430, %v1428
    %v1479 = vpack.c.b16 %v1433, %v1431
    %v1480 = vpack.c.b16 %v1434, %v1432
    %v1481 = vpack.c.b16 %v1437, %v1435
    %v1482 = vpack.c.b16 %v1438, %v1436
    %v1483 = vpack.c.b16 %v1441, %v1439
    %v1484 = vpack.c.b16 %v1442, %v1440
    %v1485 = vpack.c.b16 %v1445, %v1443
    %v1486 = vpack.c.b16 %v1446, %v1444
    %v1487 = vpack.c.b16 %v1449, %v1447
    %v1488 = vpack.c.b16 %v1450, %v1448
    %v1489 = vpack.c.b16 %v1453, %v1451
    %v1490 = vpack.c.b16 %v1454, %v1452
    %v1491 = vpack.c.b16 %v1457, %v1455
    %v1492 = vpack.c.b16 %v1458, %v1456
    %v1493 = vpack.c.b16 %v1461, %v1459
    %v1494 = vpack.c.b16 %v1462, %v1460
    %1527 = vmatprep.subr.bf16.mxu0 %v1478
    %1528 = vmatpush1.bf16.msra.mxu0 %v1477
    %1529 = vmatprep.subr.bf16.mxu0 %v1476
    %1530 = vmatpush1.bf16.msra.mxu0 %v1475
    %1531 = vmatprep.subr.bf16.mxu0 %v1474
    %1532 = vmatpush1.bf16.msra.mxu0 %v1473
    %1533 = vmatprep.subr.bf16.mxu0 %v1472
    %1534 = vmatpush1.bf16.msra.mxu0 %v1471
    %1535 = vmatprep.subr.bf16.mxu0 %v1470
    %1536 = vmatpush1.bf16.msra.mxu0 %v1469
    %1537 = vmatprep.subr.bf16.mxu0 %v1468
    %1538 = vmatpush1.bf16.msra.mxu0 %v1467
    %1539 = vmatprep.subr.bf16.mxu0 %v1466
    %1540 = vmatpush1.bf16.msra.mxu0 %v1465
    %1541 = vmatprep.subr.bf16.mxu0 %v1464
    %1542 = vmatpush1.bf16.msra.mxu0 %v1463
    %1543 = vmatprep.subr.bf16.mxu0 %v1494
    %1544 = vmatpush2.bf16.msra.mxu0 %v1493
    %1545 = vmatprep.subr.bf16.mxu0 %v1492
    %1546 = vmatpush2.bf16.msra.mxu0 %v1491
    %1547 = vmatprep.subr.bf16.mxu0 %v1490
    %1548 = vmatpush2.bf16.msra.mxu0 %v1489
    %1549 = vmatprep.subr.bf16.mxu0 %v1488
    %1550 = vmatpush2.bf16.msra.mxu0 %v1487
    %1551 = vmatprep.subr.bf16.mxu0 %v1486
    %1552 = vmatpush2.bf16.msra.mxu0 %v1485
    %1553 = vmatprep.subr.bf16.mxu0 %v1484
    %1554 = vmatpush2.bf16.msra.mxu0 %v1483
    %1555 = vmatprep.subr.bf16.mxu0 %v1482
    %1556 = vmatpush2.bf16.msra.mxu0 %v1481
    %1557 = vmatprep.subr.bf16.mxu0 %v1480
    %1558 = vmatpush2.bf16.msra.mxu0 %v1479
    %1559 = vmatprep.mubr.bf16.mxu0 %v1366
    %1560 = vmatmul.mubr.bf16.gmra.mxu0 %v1365
    %v1561 = vpop.f32.mrf.mxu0
    %v1562 = vadd.f32 0.0, %v1561
    %v1563 = vpop.f32.mrf.mxu0
    %v1564 = vadd.f32 0.0, %v1563
    %v1565 = vpop.f32.mrf.mxu0
    %v1566 = vpop.f32.mrf.mxu0
    %1567 = vdwg.mxu0
    %v1568 = vrot.slane %v1562, 4
    %v1569 = vadd.f32 %v1562, %v1568
    %v1570 = vrot.slane %v1569, 2
    %v1571 = vadd.f32 %v1569, %v1570
    %v1572 = vrot.slane %v1571, 1
    %v1573 = vadd.f32 %v1571, %v1572
    %v1574 = vrot.slane %v1564, 4
    %v1575 = vadd.f32 %v1564, %v1574
    %v1576 = vrot.slane %v1575, 2
    %v1577 = vadd.f32 %v1575, %v1576
    %v1578 = vrot.slane %v1577, 1
    %v1579 = vadd.f32 %v1577, %v1578
    %v1580 = vmul.f32 %v1573, 0.125
    %v1581 = vmul.f32 %v1579, 0.125
    %v1582 = vmul.f32 %v1562, %v1562
    %v1583 = vmul.f32 %v1564, %v1564
    %v1584 = vrot.slane %v1582, 4
    %v1585 = vadd.f32 %v1582, %v1584
    %v1586 = vrot.slane %v1585, 2
    %v1587 = vadd.f32 %v1585, %v1586
    %v1588 = vrot.slane %v1587, 1
    %v1589 = vadd.f32 %v1587, %v1588
    %v1590 = vrot.slane %v1583, 4
    %v1591 = vadd.f32 %v1583, %v1590
    %v1592 = vrot.slane %v1591, 2
    %v1593 = vadd.f32 %v1591, %v1592
    %v1594 = vrot.slane %v1593, 1
    %v1595 = vadd.f32 %v1593, %v1594
    %v1596 = vmul.f32 %v1589, 0.125
    %v1597 = vmul.f32 %v1595, 0.125
    %v1598 = vmul.f32 %v1580, %v1580
    %v1599 = vmul.f32 %v1581, %v1581
    %v1600 = vsub.f32 %v1596, %v1598
    %v1601 = vsub.f32 %v1597, %v1599
    %v1602 = vmax.f32 %v1600, 0.0
    %v1603 = vmax.f32 %v1601, 0.0
    %v1604 = vsub.f32 %v1562, %v1580
    %v1605 = vsub.f32 %v1564, %v1581
    %v1606 = vadd.f32 %v1602, 1e-05
    %v1607 = vadd.f32 %v1603, 1e-05
    %v1608 = vrsqrt.pop %v1606
    %v1609 = vrsqrt.pop %v1607
    %v1610 = vmul.f32 %v1604, %v1608
    %v1611 = vmul.f32 %v1605, %v1609
    %v1612 = vmax.f32 %v1610, 0.0
    %v1613 = vmax.f32 %v1611, 0.0
    %v1614 = vpack.c.bf16 %v1612, %v1612
    %v1615 = vpack.c.bf16 %v1613, %v1613
    %v1648 = vunpack.c.l.b16 %v1333
    %v1649 = vunpack.c.h.b16 %v1333
    %v1650 = vunpack.c.l.b16 %v1334
    %v1651 = vunpack.c.h.b16 %v1334
    %v1652 = vunpack.c.l.b16 %v1335
    %v1653 = vunpack.c.h.b16 %v1335
    %v1654 = vunpack.c.l.b16 %v1336
    %v1655 = vunpack.c.h.b16 %v1336
    %v1656 = vunpack.c.l.b16 %v1337
    %v1657 = vunpack.c.h.b16 %v1337
    %v1658 = vunpack.c.l.b16 %v1338
    %v1659 = vunpack.c.h.b16 %v1338
    %v1660 = vunpack.c.l.b16 %v1339
    %v1661 = vunpack.c.h.b16 %v1339
    %v1662 = vunpack.c.l.b16 %v1340
    %v1663 = vunpack.c.h.b16 %v1340
    %v1664 = vunpack.c.l.b16 %v1341
    %v1665 = vunpack.c.h.b16 %v1341
    %v1666 = vunpack.c.l.b16 %v1342
    %v1667 = vunpack.c.h.b16 %v1342
    %v1668 = vunpack.c.l.b16 %v1343
    %v1669 = vunpack.c.h.b16 %v1343
    %v1670 = vunpack.c.l.b16 %v1344
    %v1671 = vunpack.c.h.b16 %v1344
    %v1672 = vunpack.c.l.b16 %v1345
    %v1673 = vunpack.c.h.b16 %v1345
    %v1674 = vunpack.c.l.b16 %v1346
    %v1675 = vunpack.c.h.b16 %v1346
    %v1676 = vunpack.c.l.b16 %v1347
    %v1677 = vunpack.c.h.b16 %v1347
    %v1678 = vunpack.c.l.b16 %v1348
    %v1679 = vunpack.c.h.b16 %v1348
    %v1680 = vunpack.c.l.b16 %v1349
    %v1681 = vunpack.c.h.b16 %v1349
    %v1682 = vunpack.c.l.b16 %v1350
    %v1683 = vunpack.c.h.b16 %v1350
    %v1684 = vunpack.c.l.b16 %v1351
    %v1685 = vunpack.c.h.b16 %v1351
    %v1686 = vunpack.c.l.b16 %v1352
    %v1687 = vunpack.c.h.b16 %v1352
    %v1688 = vunpack.c.l.b16 %v1353
    %v1689 = vunpack.c.h.b16 %v1353
    %v1690 = vunpack.c.l.b16 %v1354
    %v1691 = vunpack.c.h.b16 %v1354
    %v1692 = vunpack.c.l.b16 %v1355
    %v1693 = vunpack.c.h.b16 %v1355
    %v1694 = vunpack.c.l.b16 %v1356
    %v1695 = vunpack.c.h.b16 %v1356
    %v1696 = vunpack.c.l.b16 %v1357
    %v1697 = vunpack.c.h.b16 %v1357
    %v1698 = vunpack.c.l.b16 %v1358
    %v1699 = vunpack.c.h.b16 %v1358
    %v1700 = vunpack.c.l.b16 %v1359
    %v1701 = vunpack.c.h.b16 %v1359
    %v1702 = vunpack.c.l.b16 %v1360
    %v1703 = vunpack.c.h.b16 %v1360
    %v1704 = vunpack.c.l.b16 %v1361
    %v1705 = vunpack.c.h.b16 %v1361
    %v1706 = vunpack.c.l.b16 %v1362
    %v1707 = vunpack.c.h.b16 %v1362
    %v1708 = vunpack.c.l.b16 %v1363
    %v1709 = vunpack.c.h.b16 %v1363
    %v1710 = vunpack.c.l.b16 %v1364
    %v1711 = vunpack.c.h.b16 %v1364
    %v1712 = vpack.c.b16 %v1650, %v1648
    %v1713 = vpack.c.b16 %v1651, %v1649
    %v1714 = vpack.c.b16 %v1654, %v1652
    %v1715 = vpack.c.b16 %v1655, %v1653
    %v1716 = vpack.c.b16 %v1658, %v1656
    %v1717 = vpack.c.b16 %v1659, %v1657
    %v1718 = vpack.c.b16 %v1662, %v1660
    %v1719 = vpack.c.b16 %v1663, %v1661
    %v1720 = vpack.c.b16 %v1666, %v1664
    %v1721 = vpack.c.b16 %v1667, %v1665
    %v1722 = vpack.c.b16 %v1670, %v1668
    %v1723 = vpack.c.b16 %v1671, %v1669
    %v1724 = vpack.c.b16 %v1674, %v1672
    %v1725 = vpack.c.b16 %v1675, %v1673
    %v1726 = vpack.c.b16 %v1678, %v1676
    %v1727 = vpack.c.b16 %v1679, %v1677
    %v1728 = vpack.c.b16 %v1682, %v1680
    %v1729 = vpack.c.b16 %v1683, %v1681
    %v1730 = vpack.c.b16 %v1686, %v1684
    %v1731 = vpack.c.b16 %v1687, %v1685
    %v1732 = vpack.c.b16 %v1690, %v1688
    %v1733 = vpack.c.b16 %v1691, %v1689
    %v1734 = vpack.c.b16 %v1694, %v1692
    %v1735 = vpack.c.b16 %v1695, %v1693
    %v1736 = vpack.c.b16 %v1698, %v1696
    %v1737 = vpack.c.b16 %v1699, %v1697
    %v1738 = vpack.c.b16 %v1702, %v1700
    %v1739 = vpack.c.b16 %v1703, %v1701
    %v1740 = vpack.c.b16 %v1706, %v1704
    %v1741 = vpack.c.b16 %v1707, %v1705
    %v1742 = vpack.c.b16 %v1710, %v1708
    %v1743 = vpack.c.b16 %v1711, %v1709
    %1776 = vmatprep.subr.bf16.mxu0 %v1727
    %1777 = vmatpush1.bf16.msra.mxu0 %v1726
    %1778 = vmatprep.subr.bf16.mxu0 %v1725
    %1779 = vmatpush1.bf16.msra.mxu0 %v1724
    %1780 = vmatprep.subr.bf16.mxu0 %v1723
    %1781 = vmatpush1.bf16.msra.mxu0 %v1722
    %1782 = vmatprep.subr.bf16.mxu0 %v1721
    %1783 = vmatpush1.bf16.msra.mxu0 %v1720
    %1784 = vmatprep.subr.bf16.mxu0 %v1719
    %1785 = vmatpush1.bf16.msra.mxu0 %v1718
    %1786 = vmatprep.subr.bf16.mxu0 %v1717
    %1787 = vmatpush1.bf16.msra.mxu0 %v1716
    %1788 = vmatprep.subr.bf16.mxu0 %v1715
    %1789 = vmatpush1.bf16.msra.mxu0 %v1714
    %1790 = vmatprep.subr.bf16.mxu0 %v1713
    %1791 = vmatpush1.bf16.msra.mxu0 %v1712
    %1792 = vmatprep.subr.bf16.mxu0 %v1743
    %1793 = vmatpush2.bf16.msra.mxu0 %v1742
    %1794 = vmatprep.subr.bf16.mxu0 %v1741
    %1795 = vmatpush2.bf16.msra.mxu0 %v1740
    %1796 = vmatprep.subr.bf16.mxu0 %v1739
    %1797 = vmatpush2.bf16.msra.mxu0 %v1738
    %1798 = vmatprep.subr.bf16.mxu0 %v1737
    %1799 = vmatpush2.bf16.msra.mxu0 %v1736
    %1800 = vmatprep.subr.bf16.mxu0 %v1735
    %1801 = vmatpush2.bf16.msra.mxu0 %v1734
    %1802 = vmatprep.subr.bf16.mxu0 %v1733
    %1803 = vmatpush2.bf16.msra.mxu0 %v1732
    %1804 = vmatprep.subr.bf16.mxu0 %v1731
    %1805 = vmatpush2.bf16.msra.mxu0 %v1730
    %1806 = vmatprep.subr.bf16.mxu0 %v1729
    %1807 = vmatpush2.bf16.msra.mxu0 %v1728
    %1808 = vmatprep.mubr.bf16.mxu0 %v1615
    %1809 = vmatmul.mubr.bf16.gmra.mxu0 %v1614
    %v1810 = vpop.f32.mrf.mxu0
    %v1811 = vadd.f32 0.0, %v1810
    %v1812 = vpop.f32.mrf.mxu0
    %v1813 = vadd.f32 0.0, %v1812
    %v1814 = vpop.f32.mrf.mxu0
    %v1815 = vpop.f32.mrf.mxu0
    %1816 = vdwg.mxu0
    %v1817 = vrot.slane %v1811, 4
    %v1818 = vadd.f32 %v1811, %v1817
    %v1819 = vrot.slane %v1818, 2
    %v1820 = vadd.f32 %v1818, %v1819
    %v1821 = vrot.slane %v1820, 1
    %v1822 = vadd.f32 %v1820, %v1821
    %v1823 = vrot.slane %v1813, 4
    %v1824 = vadd.f32 %v1813, %v1823
    %v1825 = vrot.slane %v1824, 2
    %v1826 = vadd.f32 %v1824, %v1825
    %v1827 = vrot.slane %v1826, 1
    %v1828 = vadd.f32 %v1826, %v1827
    %v1829 = vmul.f32 %v1822, 0.125
    %v1830 = vmul.f32 %v1828, 0.125
    %v1831 = vmul.f32 %v1811, %v1811
    %v1832 = vmul.f32 %v1813, %v1813
    %v1833 = vrot.slane %v1831, 4
    %v1834 = vadd.f32 %v1831, %v1833
    %v1835 = vrot.slane %v1834, 2
    %v1836 = vadd.f32 %v1834, %v1835
    %v1837 = vrot.slane %v1836, 1
    %v1838 = vadd.f32 %v1836, %v1837
    %v1839 = vrot.slane %v1832, 4
    %v1840 = vadd.f32 %v1832, %v1839
    %v1841 = vrot.slane %v1840, 2
    %v1842 = vadd.f32 %v1840, %v1841
    %v1843 = vrot.slane %v1842, 1
    %v1844 = vadd.f32 %v1842, %v1843
    %v1845 = vmul.f32 %v1838, 0.125
    %v1846 = vmul.f32 %v1844, 0.125
    %v1847 = vmul.f32 %v1829, %v1829
    %v1848 = vmul.f32 %v1830, %v1830
    %v1849 = vsub.f32 %v1845, %v1847
    %v1850 = vsub.f32 %v1846, %v1848
    %v1851 = vmax.f32 %v1849, 0.0
    %v1852 = vmax.f32 %v1850, 0.0
    %v1853 = vsub.f32 %v1811, %v1829
    %v1854 = vsub.f32 %v1813, %v1830
    %v1855 = vadd.f32 %v1851, 1e-05
    %v1856 = vadd.f32 %v1852, 1e-05
    %v1857 = vrsqrt.pop %v1855
    %v1858 = vrsqrt.pop %v1856
    %v1859 = vmul.f32 %v1853, %v1857
    %v1860 = vmul.f32 %v1854, %v1858
    %v1861 = vadd.f32 %v1296, %v1859
    %v1862 = vadd.f32 %v1297, %v1860
    %v1863 = vmax.f32 %v1861, 0.0
    %v1864 = vmax.f32 %v1862, 0.0
    %s1865 = smul.u32 4, 32
    %s1866 = smul.u32 %s1865, 1
    %s1867 = sshll.u32 %s1866, 4
    %1868 = dma.done %s69, %s1867
    %v1869 = vld [vmem:[%s2 + $0x2] sm:$0x1]
    %v1870 = vpack.c.bf16 %v1863, %v1863
    %v1871 = vpack.c.bf16 %v1864, %v1864
    %v1872 = vld [vmem:[#allocation3] sm:$0xf]
    %v1873 = vld [vmem:[#allocation3 + $0x4] sm:$0xf]
    %v1874 = vld [vmem:[#allocation3 + $0x8] sm:$0xf]
    %v1875 = vld [vmem:[#allocation3 + $0xc] sm:$0xf]
    %v1876 = vld [vmem:[#allocation3 + $0x10] sm:$0xf]
    %v1877 = vld [vmem:[#allocation3 + $0x14] sm:$0xf]
    %v1878 = vld [vmem:[#allocation3 + $0x18] sm:$0xf]
    %v1879 = vld [vmem:[#allocation3 + $0x1c] sm:$0xf]
    %v1880 = vld [vmem:[#allocation3 + $0x20] sm:$0xf]
    %v1881 = vld [vmem:[#allocation3 + $0x24] sm:$0xf]
    %v1882 = vld [vmem:[#allocation3 + $0x28] sm:$0xf]
    %v1883 = vld [vmem:[#allocation3 + $0x2c] sm:$0xf]
    %v1884 = vld [vmem:[#allocation3 + $0x30] sm:$0xf]
    %v1885 = vld [vmem:[#allocation3 + $0x34] sm:$0xf]
    %v1886 = vld [vmem:[#allocation3 + $0x38] sm:$0xf]
    %v1887 = vld [vmem:[#allocation3 + $0x3c] sm:$0xf]
    %v1888 = vld [vmem:[#allocation3 + $0x40] sm:$0xf]
    %v1889 = vld [vmem:[#allocation3 + $0x44] sm:$0xf]
    %v1890 = vld [vmem:[#allocation3 + $0x48] sm:$0xf]
    %v1891 = vld [vmem:[#allocation3 + $0x4c] sm:$0xf]
    %v1892 = vld [vmem:[#allocation3 + $0x50] sm:$0xf]
    %v1893 = vld [vmem:[#allocation3 + $0x54] sm:$0xf]
    %v1894 = vld [vmem:[#allocation3 + $0x58] sm:$0xf]
    %v1895 = vld [vmem:[#allocation3 + $0x5c] sm:$0xf]
    %v1896 = vld [vmem:[#allocation3 + $0x60] sm:$0xf]
    %v1897 = vld [vmem:[#allocation3 + $0x64] sm:$0xf]
    %v1898 = vld [vmem:[#allocation3 + $0x68] sm:$0xf]
    %v1899 = vld [vmem:[#allocation3 + $0x6c] sm:$0xf]
    %v1900 = vld [vmem:[#allocation3 + $0x70] sm:$0xf]
    %v1901 = vld [vmem:[#allocation3 + $0x74] sm:$0xf]
    %v1902 = vld [vmem:[#allocation3 + $0x78] sm:$0xf]
    %v1903 = vld [vmem:[#allocation3 + $0x7c] sm:$0xf]
    %v1905 = vlaneseq
    %v1906 = vshrl.u32 %v1905, 7
    %v1907 = vsub.s32 0, %v1906
    %v1908 = vrot.slane %v1869, %v1907
    %v1942 = vunpack.c.l.b16 %v1872
    %v1943 = vunpack.c.l.b16 %v1873
    %v1944 = vunpack.c.l.b16 %v1874
    %v1945 = vunpack.c.l.b16 %v1875
    %v1946 = vunpack.c.l.b16 %v1876
    %v1947 = vunpack.c.l.b16 %v1877
    %v1948 = vunpack.c.l.b16 %v1878
    %v1949 = vunpack.c.l.b16 %v1879
    %v1950 = vunpack.c.l.b16 %v1880
    %v1951 = vunpack.c.l.b16 %v1881
    %v1952 = vunpack.c.l.b16 %v1882
    %v1953 = vunpack.c.l.b16 %v1883
    %v1954 = vunpack.c.l.b16 %v1884
    %v1955 = vunpack.c.l.b16 %v1885
    %v1956 = vunpack.c.l.b16 %v1886
    %v1957 = vunpack.c.l.b16 %v1887
    %v1958 = vunpack.c.l.b16 %v1888
    %v1959 = vunpack.c.l.b16 %v1889
    %v1960 = vunpack.c.l.b16 %v1890
    %v1961 = vunpack.c.l.b16 %v1891
    %v1962 = vunpack.c.l.b16 %v1892
    %v1963 = vunpack.c.l.b16 %v1893
    %v1964 = vunpack.c.l.b16 %v1894
    %v1965 = vunpack.c.l.b16 %v1895
    %v1966 = vunpack.c.l.b16 %v1896
    %v1967 = vunpack.c.l.b16 %v1897
    %v1968 = vunpack.c.l.b16 %v1898
    %v1969 = vunpack.c.l.b16 %v1899
    %v1970 = vunpack.c.l.b16 %v1900
    %v1971 = vunpack.c.l.b16 %v1901
    %v1972 = vunpack.c.l.b16 %v1902
    %v1973 = vunpack.c.l.b16 %v1903
    %v1974 = vpack.c.b16 %v1943, %v1942
    %v1975 = vpack.c.b16 %v1945, %v1944
    %v1976 = vpack.c.b16 %v1947, %v1946
    %v1977 = vpack.c.b16 %v1949, %v1948
    %v1978 = vpack.c.b16 %v1951, %v1950
    %v1979 = vpack.c.b16 %v1953, %v1952
    %v1980 = vpack.c.b16 %v1955, %v1954
    %v1981 = vpack.c.b16 %v1957, %v1956
    %v1982 = vpack.c.b16 %v1959, %v1958
    %v1983 = vpack.c.b16 %v1961, %v1960
    %v1984 = vpack.c.b16 %v1963, %v1962
    %v1985 = vpack.c.b16 %v1965, %v1964
    %v1986 = vpack.c.b16 %v1967, %v1966
    %v1987 = vpack.c.b16 %v1969, %v1968
    %v1988 = vpack.c.b16 %v1971, %v1970
    %v1989 = vpack.c.b16 %v1973, %v1972
    %2006 = vmatprep.subr.bf16.mxu0 0
    %2007 = vmatpush1.bf16.msra.mxu0 %v1981
    %2008 = vmatprep.subr.bf16.mxu0 0
    %2009 = vmatpush1.bf16.msra.mxu0 %v1980
    %2010 = vmatprep.subr.bf16.mxu0 0
    %2011 = vmatpush1.bf16.msra.mxu0 %v1979
    %2012 = vmatprep.subr.bf16.mxu0 0
    %2013 = vmatpush1.bf16.msra.mxu0 %v1978
    %2014 = vmatprep.subr.bf16.mxu0 0
    %2015 = vmatpush1.bf16.msra.mxu0 %v1977
    %2016 = vmatprep.subr.bf16.mxu0 0
    %2017 = vmatpush1.bf16.msra.mxu0 %v1976
    %2018 = vmatprep.subr.bf16.mxu0 0
    %2019 = vmatpush1.bf16.msra.mxu0 %v1975
    %2020 = vmatprep.subr.bf16.mxu0 0
    %2021 = vmatpush1.bf16.msra.mxu0 %v1974
    %2022 = vmatprep.subr.bf16.mxu0 0
    %2023 = vmatpush2.bf16.msra.mxu0 %v1989
    %2024 = vmatprep.subr.bf16.mxu0 0
    %2025 = vmatpush2.bf16.msra.mxu0 %v1988
    %2026 = vmatprep.subr.bf16.mxu0 0
    %2027 = vmatpush2.bf16.msra.mxu0 %v1987
    %2028 = vmatprep.subr.bf16.mxu0 0
    %2029 = vmatpush2.bf16.msra.mxu0 %v1986
    %2030 = vmatprep.subr.bf16.mxu0 0
    %2031 = vmatpush2.bf16.msra.mxu0 %v1985
    %2032 = vmatprep.subr.bf16.mxu0 0
    %2033 = vmatpush2.bf16.msra.mxu0 %v1984
    %2034 = vmatprep.subr.bf16.mxu0 0
    %2035 = vmatpush2.bf16.msra.mxu0 %v1983
    %2036 = vmatprep.subr.bf16.mxu0 0
    %2037 = vmatpush2.bf16.msra.mxu0 %v1982
    %2038 = vmatprep.mubr.bf16.mxu0 %v1871
    %2039 = vmatmul.mubr.bf16.gmra.mxu0 %v1870
    %v2040 = vpop.f32.mrf.mxu0
    %v2041 = vadd.f32 %v1908, %v2040
    %v2042 = vpop.f32.mrf.mxu0
    %v2043 = vpop.f32.mrf.mxu0
    %v2044 = vpop.f32.mrf.mxu0
    %2045 = vdwg.mxu0
    %2046 = vst [vmem:[#allocation10] sm:$0xff] %v2041
    // Predicated region
    $region34: #{resnet_mlp_pallas.1} parent=1 // pred_check
      _
    $region35: #{resnet_mlp_pallas.1} parent=1 // pred_check_branch
      %2048 = sbr.rel (0) target = $region37
    $region36: #{resnet_mlp_pallas.1} parent=1 // pred_region
      %s2050 = ssub.s32 128, 128
      %2051 = vsyncadd [#allocation7], %s2050
      %s2053 = sshll.u32 [#allocation10], 4
      %s2054 = int_to_ptr.vmem [resolvable:$true] %s2053
      %2056 = dma.vmem_to_hbm [thread:$0]  %s2054, 128, %s5, [#allocation7]
    $region37: #{resnet_mlp_pallas.1} parent=1 // pred_fallthru
      _
    // Predicated region
    $region38: #{resnet_mlp_pallas.1} parent=1 // pred_check
      _
    $region39: #{resnet_mlp_pallas.1} parent=1 // pred_check_branch
      %2058 = sbr.rel (0) target = $region41
    $region40: #{resnet_mlp_pallas.1} parent=1 // pred_region
      %2059 = dma.done [#allocation7], 128
    $region41: #{resnet_mlp_pallas.1} parent=1 // pred_fallthru
      _
    %2060 = vsyncpa [#allocation6], 1
    %2061 = vsyncpa [#allocation9], 1
    %2062 = vsyncpa [#allocation7], 1
  %2063 = vsyncmov [#allocation4]
  %s2064 = vpop.sfrf %2063
  %p2065 = scmp.eq.s32.totalorder %s2064, 0
  %p2066 = pneg %p2065
  %2068 = shalt.err (%p2066)
  %s2069 = scalar_lea.sflag [#allocation4], 1
  %2070 = vsyncmov %s2069
  %s2071 = vpop.sfrf %2070
  %p2072 = scmp.eq.s32.totalorder %s2071, 0
  %p2073 = pneg %p2072
  %2075 = shalt.err (%p2073)
  %s2076 = scalar_lea.sflag [#allocation4], 2
  %2077 = vsyncmov %s2076
  %s2078 = vpop.sfrf %2077
  %p2079 = scmp.eq.s32.totalorder %s2078, 0
  %p2080 = pneg %p2079
  %2082 = shalt.err (%p2080)

</llo_original>
